<compile_context>
chip_gen: v5e
topology: v5e:2x2
jax: 0.10.0
libtpu: 0.0.40
codegen_flags: <defaults>
</compile_context>

<pallas_src>
import numpy as np
import jax
import jax.numpy as jnp
from jax.experimental import pallas as pl
from jax.experimental.pallas import tpu as pltpu


# ----------------------------------------------------------------------------
# Pallas kernel: relu(x @ w + add_map + bias)   (single K = C matmul)
# ----------------------------------------------------------------------------
def _bottleneck_kernel(x_ref, add_ref, w_ref, b_ref, o_ref):
    # x_ref:   (tm, C)    bf16   — original feature rows
    # add_ref: (tm, Cout) bf16   — summed, upsampled pyramid contributions
    # w_ref:   (C, Cout)  bf16   — bottleneck weight chunk for the raw features
    # b_ref:   (1, Cout)  f32    — bottleneck bias
    # o_ref:   (tm, Cout) bf16 (or f32)
    acc = jnp.dot(x_ref[...], w_ref[...], preferred_element_type=jnp.float32)
    acc = acc + add_ref[...].astype(jnp.float32) + b_ref[...]
    o_ref[...] = jnp.maximum(acc, 0.0).astype(o_ref.dtype)


def _pick_tile_and_vmem(M, C, Cout):
    """Row tile + scoped-VMEM limit sized from the chip's VMEM capacity."""
    try:
        phys = pltpu.get_tpu_info().vmem_capacity_bytes
    except Exception:
        phys = 64 << 20                       # v7x per-core floor
    # ~48 MiB on a 64 MiB part (v7x), ~96 MiB on 128 MiB parts (v5e/v6e).
    vmem_limit = max(32 << 20, min((phys * 3) // 4, 96 << 20))
    # Resident (grid-constant, single-buffered) blocks: bf16 weight + f32 bias.
    resident = 2 * C * Cout + 4 * Cout
    # Streaming bytes per pixel row, double-buffered: bf16 x, add-map, out.
    per_row = 2 * (2 * C + 2 * Cout + 2 * Cout)
    headroom = 4 << 20                        # internal scratch / retiling slack
    tm = (vmem_limit - resident - headroom) // max(per_row, 1)
    tm = max(256, min(1024, (tm // 256) * 256))
    if M <= tm:
        tm = M                                # single full-extent row block
    return int(tm), int(vmem_limit)


def fused_bottleneck(x, add_map, w, bias, *, out_dtype=jnp.bfloat16):
    """relu(x @ w + add_map + bias) with resident weights and a 1-D row grid.

    x:       (M, C)    bf16
    add_map: (M, Cout) bf16
    w:       (C, Cout) bf16
    bias:    (Cout,)   f32
    """
    M, C = x.shape
    Cout = w.shape[1]
    tm, vmem_limit = _pick_tile_and_vmem(M, C, Cout)
    bias2d = bias.reshape(1, Cout).astype(jnp.float32)

    def build(single_buffer_consts):
        # Weight / bias block indices are constant over the (row-only) grid:
        # they are fetched exactly once.  Single-buffering halves their VMEM.
        if single_buffer_consts:
            w_spec = pl.BlockSpec((C, Cout), lambda i: (0, 0),
                                  pipeline_mode=pl.Buffered(1))
            b_spec = pl.BlockSpec((1, Cout), lambda i: (0, 0),
                                  pipeline_mode=pl.Buffered(1))
        else:
            w_spec = pl.BlockSpec((C, Cout), lambda i: (0, 0))
            b_spec = pl.BlockSpec((1, Cout), lambda i: (0, 0))
        return pl.pallas_call(
            _bottleneck_kernel,
            out_shape=jax.ShapeDtypeStruct((M, Cout), out_dtype),
            grid_spec=pltpu.PrefetchScalarGridSpec(
                num_scalar_prefetch=0,
                grid=(pl.cdiv(M, tm),),
                in_specs=[
                    pl.BlockSpec((tm, C), lambda i: (i, 0)),
                    pl.BlockSpec((tm, Cout), lambda i: (i, 0)),
                    w_spec,
                    b_spec,
                ],
                out_specs=pl.BlockSpec((tm, Cout), lambda i: (i, 0)),
            ),
            compiler_params=pltpu.CompilerParams(
                # Rows are independent: shards across v7x's two TensorCores
                # (each core keeps its own small resident weight copy).
                dimension_semantics=("parallel",),
                vmem_limit_bytes=vmem_limit,
            ),
        )

    try:
        return build(True)(x, add_map, w, bias2d)
    except Exception:
        # TODO(synk): pl.Buffered(1) single-buffering rejected on this JAX /
        # Mosaic version; fall back to default double-buffering (only costs
        # 2x weight VMEM — weights are still fetched once).
        return build(False)(x, add_map, w, bias2d)


# ----------------------------------------------------------------------------
# Exact linear operators for AdaptiveAvgPool2d and bilinear upsample.
# ----------------------------------------------------------------------------
def adaptive_avg_pool_matrix(in_size, out_size):
    P = np.zeros((out_size, in_size), dtype=np.float32)
    for i in range(out_size):
        start = (i * in_size) // out_size
        end = -((-(i + 1) * in_size) // out_size)  # ceil((i+1)*in/out)
        P[i, start:end] = 1.0 / (end - start)
    return jnp.asarray(P)


def bilinear_upsample_matrix(in_size, out_size, align_corners=False):
    # TODO(synk): align_corners=False matches modern F.upsample/F.interpolate;
    # if the reference relies on legacy (pre-0.4) align_corners=True semantics,
    # pass align_corners=True here.
    U = np.zeros((out_size, in_size), dtype=np.float32)
    for y in range(out_size):
        if align_corners:
            src = y * (in_size - 1) / (out_size - 1) if out_size > 1 else 0.0
        else:
            src = max((y + 0.5) * in_size / out_size - 0.5, 0.0)
        i0 = min(int(np.floor(src)), in_size - 1)
        i1 = min(i0 + 1, in_size - 1)
        frac = src - i0
        U[y, i0] += 1.0 - frac
        U[y, i1] += frac
    return jnp.asarray(U)


# ----------------------------------------------------------------------------
# PSPModule forward
# ----------------------------------------------------------------------------
def psp_module_forward(feats_nchw, params, sizes=(1, 2, 3, 6),
                       out_dtype=jnp.bfloat16):
    N, C, H, W = feats_nchw.shape
    bneck_w = params["bneck_w"]                 # ((len(sizes)+1)*C, Cout), f32
    Cout = bneck_w.shape[1]

    # NHWC, cast to bf16 once (single relayout pass of the full-res map).
    x_bf = jnp.transpose(feats_nchw, (0, 2, 3, 1)).astype(jnp.bfloat16)

    # --- merged adaptive-avg-pool over H: ONE pass over the full-res map ----
    Ph_all = jnp.concatenate([adaptive_avg_pool_matrix(H, s) for s in sizes],
                             axis=0)                       # (sum(sizes), H)
    pooled_rows = jnp.einsum("ph,nhwc->npwc", Ph_all, x_bf)  # f32, tiny-ish

    # --- per-branch tiny math (<= 6x6 spatial), all in f32 -------------------
    # pool_W -> stage 1x1 conv -> bottleneck chunk -> upsample_H; the final
    # upsample_W + sum over branches is done as ONE contraction via
    # concatenation along the contracted (pooled-W) axis.
    tmps, uw_cols, off = [], [], 0
    for t, s in enumerate(sizes):
        rows = pooled_rows[:, off:off + s]                  # (N, s, W, C)
        off += s
        Pw = adaptive_avg_pool_matrix(W, s)                 # (s, W)
        pooled = jnp.einsum("qw,npwc->npqc", Pw, rows)      # (N, s, s, C)
        small = pooled @ params["stage_w"][t].T             # stage 1x1, no bias
        small = small @ bneck_w[t * C:(t + 1) * C]          # (N, s, s, Cout)
        Uh = bilinear_upsample_matrix(s, H)                 # (H, s)
        Uw = bilinear_upsample_matrix(s, W)                 # (W, s)
        tmps.append(jnp.einsum("hi,nijc->nhjc", Uh, small))  # (N, H, s, Cout)
        uw_cols.append(Uw)
    tmp_cat = jnp.concatenate(tmps, axis=2)                 # (N, H, sum s, Cout)
    Uw_cat = jnp.concatenate(uw_cols, axis=1)               # (W, sum s)
    add_map = jnp.einsum("wj,nhjc->nhwc", Uw_cat, tmp_cat)  # (N, H, W, Cout)
    add_map = add_map.astype(jnp.bfloat16).reshape(N * H * W, Cout)

    # --- Pallas: relu(x @ w_last + add_map + bias), K = C --------------------
    w_last = bneck_w[len(sizes) * C:].astype(jnp.bfloat16)  # (C, Cout)
    out = fused_bottleneck(x_bf.reshape(N * H * W, C), add_map, w_last,
                           params["bneck_b"], out_dtype=out_dtype)
    out = out.reshape(N, H, W, Cout)
    # Keep NCHW for parity with the PyTorch module (relayout done in bf16).
    # If the downstream consumer accepts NHWC, drop this transpose entirely.
    return jnp.transpose(out, (0, 3, 1, 2))


# ----------------------------------------------------------------------------
# Pure-JAX f32 reference (direct transcription of the PyTorch module).
# ----------------------------------------------------------------------------
def psp_reference(feats_nchw, params, sizes=(1, 2, 3, 6)):
    N, C, H, W = feats_nchw.shape
    x = jnp.transpose(feats_nchw, (0, 2, 3, 1))
    branches = []
    for t, s in enumerate(sizes):
        Ph = adaptive_avg_pool_matrix(H, s)
        Pw = adaptive_avg_pool_matrix(W, s)
        pooled = jnp.einsum("ih,jw,nhwc->nijc", Ph, Pw, x)
        conv = pooled @ params["stage_w"][t].T
        Uh = bilinear_upsample_matrix(s, H)
        Uw = bilinear_upsample_matrix(s, W)
        branches.append(jnp.einsum("hi,wj,nijc->nhwc", Uh, Uw, conv))
    branches.append(x)
    cat = jnp.concatenate(branches, axis=-1).reshape(N * H * W, -1)
    out = jnp.maximum(cat @ params["bneck_w"] + params["bneck_b"], 0.0)
    return jnp.transpose(out.reshape(N, H, W, -1), (0, 3, 1, 2))


def init_params(key, features, out_features, sizes=(1, 2, 3, 6)):
    keys = jax.random.split(key, len(sizes) + 2)
    stage_w = [0.1 * jax.random.normal(keys[i], (features, features), jnp.float32)
               for i in range(len(sizes))]
    k_in = features * (len(sizes) + 1)
    # bottleneck weight stored as (K_in, Cout) = transposed PyTorch (Cout, K_in, 1, 1)
    bneck_w = 0.1 * jax.random.normal(keys[-2], (k_in, out_features), jnp.float32)
    bneck_b = 0.1 * jax.random.normal(keys[-1], (out_features,), jnp.float32)
    return {"stage_w": stage_w, "bneck_w": bneck_w, "bneck_b": bneck_b}


if __name__ == "__main__":
    key = jax.random.PRNGKey(0)
    k_x, k_p = jax.random.split(key)

    N, C, H, W = 2, 4, 16, 16
    OUT_FEATURES = 32            # small stand-in for the default 1024
    SIZES = (1, 2, 3, 6)

    feats = jax.random.normal(k_x, (N, C, H, W), jnp.float32)
    params = init_params(k_p, C, OUT_FEATURES, SIZES)

    # Called eagerly here so the single-buffering fallback can engage if
    # needed; in production wrap psp_module_forward in jax.jit.
    out = psp_module_forward(feats, params, SIZES)
    out = jax.block_until_ready(out)

    assert out.shape == (N, OUT_FEATURES, H, W), out.shape
    assert out.dtype == jnp.bfloat16
    assert bool(jnp.all(out.astype(jnp.float32) >= 0.0))  # ReLU

    ref = psp_reference(feats, params, SIZES)
    max_err = float(jnp.max(jnp.abs(out.astype(jnp.float32) - ref)))
    assert max_err < 5e-2, f"max abs err vs f32 reference: {max_err}"

    print("KERNEL_OK")
</pallas_src>

<mosaic_0001>
module attributes {stable_mosaic.version = 11 : i64} {
  func.func @_bottleneck_kernel(%arg0: i32, %arg1: memref<512x4xbf16, #tpu.memory_space<vmem>>, %arg2: memref<512x32xbf16, #tpu.memory_space<vmem>>, %arg3: memref<4x32xbf16, #tpu.memory_space<vmem>>, %arg4: memref<1x32xf32, #tpu.memory_space<vmem>>, %arg5: memref<512x32xbf16, #tpu.memory_space<vmem>>) attributes {dimension_semantics = [#tpu.dimension_semantics<parallel>], iteration_bounds = array<i64: 1>, scalar_prefetch = 0 : i64, scratch_operands = 0 : i64, tpu.core_type = #tpu.core_type<tc>, window_params = [{transform_indices = @transform_0, window_bounds = array<i64: 512, 4>}, {transform_indices = @transform_1, window_bounds = array<i64: 512, 32>}, {pipeline_mode = #tpu.pipeline_mode<synchronous>, transform_indices = @transform_2, window_bounds = array<i64: 4, 32>}, {pipeline_mode = #tpu.pipeline_mode<synchronous>, transform_indices = @transform_3, window_bounds = array<i64: 1, 32>}, {transform_indices = @transform_4, window_bounds = array<i64: 512, 32>}]} {
    %c0 = arith.constant 0 : index
    %c0_0 = arith.constant 0 : index
    %0 = vector.load %arg1[%c0, %c0_0] : memref<512x4xbf16, #tpu.memory_space<vmem>>, vector<512x4xbf16>
    %c0_1 = arith.constant 0 : index
    %c0_2 = arith.constant 0 : index
    %1 = vector.load %arg3[%c0_1, %c0_2] : memref<4x32xbf16, #tpu.memory_space<vmem>>, vector<4x32xbf16>
    %cst = arith.constant dense<0.000000e+00> : vector<512x32xf32>
    %2 = tpu.matmul %0, %1, %cst {dimension_numbers = #tpu.dot_dimension_numbers<[1], [0], [0], [1], [0, 0, 1, 1], [], []>} : vector<512x4xbf16>, vector<4x32xbf16>, vector<512x32xf32> -> vector<512x32xf32>
    %c0_3 = arith.constant 0 : index
    %c0_4 = arith.constant 0 : index
    %3 = vector.load %arg2[%c0_3, %c0_4] : memref<512x32xbf16, #tpu.memory_space<vmem>>, vector<512x32xbf16>
    %4 = arith.extf %3 : vector<512x32xbf16> to vector<512x32xf32>
    %5 = arith.addf %2, %4 : vector<512x32xf32>
    %c0_5 = arith.constant 0 : index
    %c0_6 = arith.constant 0 : index
    %6 = vector.load %arg4[%c0_5, %c0_6] : memref<1x32xf32, #tpu.memory_space<vmem>>, vector<1x32xf32>
    %7 = vector.broadcast %6 : vector<1x32xf32> to vector<512x32xf32>
    %8 = arith.addf %5, %7 : vector<512x32xf32>
    %cst_7 = arith.constant 0.000000e+00 : f32
    %9 = vector.broadcast %cst_7 : f32 to vector<512x32xf32>
    %10 = arith.maximumf %8, %9 : vector<512x32xf32>
    %11 = arith.truncf %10 : vector<512x32xf32> to vector<512x32xbf16>
    %c0_8 = arith.constant 0 : index
    %c0_9 = arith.constant 0 : index
    %12 = vector.load %arg5[%c0_8, %c0_9] : memref<512x32xbf16, #tpu.memory_space<vmem>>, vector<512x32xbf16>
    tpu.vector_store %arg5[%c0_8, %c0_9], %11 {strides = array<i32>} : memref<512x32xbf16, #tpu.memory_space<vmem>>, vector<512x32xbf16>,
    return
  }
  func.func @transform_0(%arg0: i32) -> (i32, i32) {
    %c0_i32 = arith.constant 0 : i32
    %c0_i32_0 = arith.constant 0 : i32
    return %arg0, %c0_i32 : i32, i32
  }
  func.func @transform_1(%arg0: i32) -> (i32, i32) {
    %c0_i32 = arith.constant 0 : i32
    %c0_i32_0 = arith.constant 0 : i32
    return %arg0, %c0_i32 : i32, i32
  }
  func.func @transform_2(%arg0: i32) -> (i32, i32) {
    %c0_i32 = arith.constant 0 : i32
    %c0_i32_0 = arith.constant 0 : i32
    %c0_i32_1 = arith.constant 0 : i32
    return %c0_i32, %c0_i32_0 : i32, i32
  }
  func.func @transform_3(%arg0: i32) -> (i32, i32) {
    %c0_i32 = arith.constant 0 : i32
    %c0_i32_0 = arith.constant 0 : i32
    %c0_i32_1 = arith.constant 0 : i32
    return %c0_i32, %c0_i32_0 : i32, i32
  }
  func.func @transform_4(%arg0: i32) -> (i32, i32) {
    %c0_i32 = arith.constant 0 : i32
    %c0_i32_0 = arith.constant 0 : i32
    return %arg0, %c0_i32 : i32, i32
  }
}

module attributes {stable_mosaic.version = 11 : i64} {
  func.func @_bottleneck_kernel(%arg0: i32, %arg1: memref<512x4xbf16, #tpu.memory_space<vmem>>, %arg2: memref<512x32xbf16, #tpu.memory_space<vmem>>, %arg3: memref<4x32xbf16, #tpu.memory_space<vmem>>, %arg4: memref<1x32xf32, #tpu.memory_space<vmem>>, %arg5: memref<512x32xbf16, #tpu.memory_space<vmem>>) attributes {dimension_semantics = [#tpu.dimension_semantics<parallel>], iteration_bounds = array<i64: 1>, scalar_prefetch = 0 : i64, scratch_operands = 0 : i64, tpu.core_type = #tpu.core_type<tc>, window_params = [{transform_indices = @transform_0, window_bounds = array<i64: 512, 4>}, {transform_indices = @transform_1, window_bounds = array<i64: 512, 32>}, {pipeline_mode = #tpu.pipeline_mode<synchronous>, transform_indices = @transform_2, window_bounds = array<i64: 4, 32>}, {pipeline_mode = #tpu.pipeline_mode<synchronous>, transform_indices = @transform_3, window_bounds = array<i64: 1, 32>}, {transform_indices = @transform_4, window_bounds = array<i64: 512, 32>}]} {
    %c0 = arith.constant 0 : index
    %c0_0 = arith.constant 0 : index
    %0 = vector.load %arg1[%c0, %c0_0] : memref<512x4xbf16, #tpu.memory_space<vmem>>, vector<512x4xbf16>
    %c0_1 = arith.constant 0 : index
    %c0_2 = arith.constant 0 : index
    %1 = vector.load %arg3[%c0_1, %c0_2] : memref<4x32xbf16, #tpu.memory_space<vmem>>, vector<4x32xbf16>
    %cst = arith.constant dense<0.000000e+00> : vector<512x32xf32>
    %2 = tpu.matmul %0, %1, %cst {dimension_numbers = #tpu.dot_dimension_numbers<[1], [0], [0], [1], [0, 0, 1, 1], [], []>} : vector<512x4xbf16>, vector<4x32xbf16>, vector<512x32xf32> -> vector<512x32xf32>
    %c0_3 = arith.constant 0 : index
    %c0_4 = arith.constant 0 : index
    %3 = vector.load %arg2[%c0_3, %c0_4] : memref<512x32xbf16, #tpu.memory_space<vmem>>, vector<512x32xbf16>
    %4 = arith.extf %3 : vector<512x32xbf16> to vector<512x32xf32>
    %5 = arith.addf %2, %4 : vector<512x32xf32>
    %c0_5 = arith.constant 0 : index
    %c0_6 = arith.constant 0 : index
    %6 = vector.load %arg4[%c0_5, %c0_6] : memref<1x32xf32, #tpu.memory_space<vmem>>, vector<1x32xf32>
    %7 = vector.broadcast %6 : vector<1x32xf32> to vector<512x32xf32>
    %8 = arith.addf %5, %7 : vector<512x32xf32>
    %cst_7 = arith.constant 0.000000e+00 : f32
    %9 = vector.broadcast %cst_7 : f32 to vector<512x32xf32>
    %10 = arith.maximumf %8, %9 : vector<512x32xf32>
    %11 = arith.truncf %10 : vector<512x32xf32> to vector<512x32xbf16>
    %c0_8 = arith.constant 0 : index
    %c0_9 = arith.constant 0 : index
    %12 = vector.load %arg5[%c0_8, %c0_9] : memref<512x32xbf16, #tpu.memory_space<vmem>>, vector<512x32xbf16>
    tpu.vector_store %arg5[%c0_8, %c0_9], %11 {strides = array<i32>} : memref<512x32xbf16, #tpu.memory_space<vmem>>, vector<512x32xbf16>,
    return
  }
  func.func @transform_0(%arg0: i32) -> (i32, i32) {
    %c0_i32 = arith.constant 0 : i32
    %c0_i32_0 = arith.constant 0 : i32
    return %arg0, %c0_i32 : i32, i32
  }
  func.func @transform_1(%arg0: i32) -> (i32, i32) {
    %c0_i32 = arith.constant 0 : i32
    %c0_i32_0 = arith.constant 0 : i32
    return %arg0, %c0_i32 : i32, i32
  }
  func.func @transform_2(%arg0: i32) -> (i32, i32) {
    %c0_i32 = arith.constant 0 : i32
    %c0_i32_0 = arith.constant 0 : i32
    %c0_i32_1 = arith.constant 0 : i32
    return %c0_i32, %c0_i32_0 : i32, i32
  }
  func.func @transform_3(%arg0: i32) -> (i32, i32) {
    %c0_i32 = arith.constant 0 : i32
    %c0_i32_0 = arith.constant 0 : i32
    %c0_i32_1 = arith.constant 0 : i32
    return %c0_i32, %c0_i32_0 : i32, i32
  }
  func.func @transform_4(%arg0: i32) -> (i32, i32) {
    %c0_i32 = arith.constant 0 : i32
    %c0_i32_0 = arith.constant 0 : i32
    return %arg0, %c0_i32 : i32, i32
  }
}

</mosaic_0001>

<llo_original>
// kernel: tpu_custom_call.1
$region0: #{tpu_custom_call.1}
  #allocation0 [shape = 'u32[]', space=smem, size = 0x4, offset = 0x4, fixed_abs, tag = 'smem constant byte address 0x4 - core index']
  #allocation1 [shape = 'u32[72,128]{1,0:T(1,128)}', space=vmem, size = 0x9000, scoped, tag = 'internal scratch']
  %s0 = inlined_call_operand.vmem [shape: bf16[512,4], index: 0, kind: input, shape index: {}]
  %s1 = inlined_call_operand.vmem [shape: bf16[512,32], index: 1, kind: input, shape index: {}]
  %s2 = inlined_call_operand.vmem [shape: bf16[4,32], index: 2, kind: input, shape index: {}]
  %s3 = inlined_call_operand.vmem [shape: f32[1,32], index: 3, kind: input, shape index: {}]
  %s4 = inlined_call_operand.vmem [shape: bf16[512,32], index: 4, kind: output, shape index: {}]
  %s5 = sld [smem:[#allocation0]]
  $region26: #{tpu_custom_call.1} parent=0
    _
  %s7 = ssub.s32 1, %s5
  %s8 = scalar_select 0, %s7, %s5
  // Predicated region
  $region2: #{tpu_custom_call.1} parent=0 // pred_check
    _
  $region3: #{tpu_custom_call.1} parent=0 // pred_check_branch
    %10 = sbr.rel (0) target = $region5
  $region4: #{tpu_custom_call.1} parent=0 // pred_region
    _
  $region5: #{tpu_custom_call.1} parent=0 // pred_fallthru
    _
  // Predicated region
  $region6: #{tpu_custom_call.1} parent=0 // pred_check
    _
  $region7: #{tpu_custom_call.1} parent=0 // pred_check_branch
    %12 = sbr.rel (0) target = $region9
  $region8: #{tpu_custom_call.1} parent=0 // pred_region
    _
  $region9: #{tpu_custom_call.1} parent=0 // pred_fallthru
    _
  // Predicated region
  $region10: #{tpu_custom_call.1} parent=0 // pred_check
    _
  $region11: #{tpu_custom_call.1} parent=0 // pred_check_branch
    %14 = sbr.rel (0) target = $region13
  $region12: #{tpu_custom_call.1} parent=0 // pred_region
    _
  $region13: #{tpu_custom_call.1} parent=0 // pred_fallthru
    _
  // Predicated region
  $region14: #{tpu_custom_call.1} parent=0 // pred_check
    _
  $region15: #{tpu_custom_call.1} parent=0 // pred_check_branch
    %16 = sbr.rel (0) target = $region17
  $region16: #{tpu_custom_call.1} parent=0 // pred_region
    _
  $region17: #{tpu_custom_call.1} parent=0 // pred_fallthru
    _
  %v18 = vld [vmem:[%s0] sm:$0xf]
  %v19 = vld [vmem:[%s0 + $0x4] sm:$0xf]
  %v20 = vld [vmem:[%s0 + $0x8] sm:$0xf]
  %v21 = vld [vmem:[%s0 + $0xc] sm:$0xf]
  %v22 = vld [vmem:[%s0 + $0x10] sm:$0xf]
  %v23 = vld [vmem:[%s0 + $0x14] sm:$0xf]
  %v24 = vld [vmem:[%s0 + $0x18] sm:$0xf]
  %v25 = vld [vmem:[%s0 + $0x1c] sm:$0xf]
  %v26 = vld [vmem:[%s0 + $0x20] sm:$0xf]
  %v27 = vld [vmem:[%s0 + $0x24] sm:$0xf]
  %v28 = vld [vmem:[%s0 + $0x28] sm:$0xf]
  %v29 = vld [vmem:[%s0 + $0x2c] sm:$0xf]
  %v30 = vld [vmem:[%s0 + $0x30] sm:$0xf]
  %v31 = vld [vmem:[%s0 + $0x34] sm:$0xf]
  %v32 = vld [vmem:[%s0 + $0x38] sm:$0xf]
  %v33 = vld [vmem:[%s0 + $0x3c] sm:$0xf]
  %v34 = vld [vmem:[%s0 + $0x40] sm:$0xf]
  %v35 = vld [vmem:[%s0 + $0x44] sm:$0xf]
  %v36 = vld [vmem:[%s0 + $0x48] sm:$0xf]
  %v37 = vld [vmem:[%s0 + $0x4c] sm:$0xf]
  %v38 = vld [vmem:[%s0 + $0x50] sm:$0xf]
  %v39 = vld [vmem:[%s0 + $0x54] sm:$0xf]
  %v40 = vld [vmem:[%s0 + $0x58] sm:$0xf]
  %v41 = vld [vmem:[%s0 + $0x5c] sm:$0xf]
  %v42 = vld [vmem:[%s0 + $0x60] sm:$0xf]
  %v43 = vld [vmem:[%s0 + $0x64] sm:$0xf]
  %v44 = vld [vmem:[%s0 + $0x68] sm:$0xf]
  %v45 = vld [vmem:[%s0 + $0x6c] sm:$0xf]
  %v46 = vld [vmem:[%s0 + $0x70] sm:$0xf]
  %v47 = vld [vmem:[%s0 + $0x74] sm:$0xf]
  %v48 = vld [vmem:[%s0 + $0x78] sm:$0xf]
  %v49 = vld [vmem:[%s0 + $0x7c] sm:$0xf]
  %v50 = vld [vmem:[%s0 + $0x80] sm:$0xf]
  %v51 = vld [vmem:[%s0 + $0x84] sm:$0xf]
  %v52 = vld [vmem:[%s0 + $0x88] sm:$0xf]
  %v53 = vld [vmem:[%s0 + $0x8c] sm:$0xf]
  %v54 = vld [vmem:[%s0 + $0x90] sm:$0xf]
  %v55 = vld [vmem:[%s0 + $0x94] sm:$0xf]
  %v56 = vld [vmem:[%s0 + $0x98] sm:$0xf]
  %v57 = vld [vmem:[%s0 + $0x9c] sm:$0xf]
  %v58 = vld [vmem:[%s0 + $0xa0] sm:$0xf]
  %v59 = vld [vmem:[%s0 + $0xa4] sm:$0xf]
  %v60 = vld [vmem:[%s0 + $0xa8] sm:$0xf]
  %v61 = vld [vmem:[%s0 + $0xac] sm:$0xf]
  %v62 = vld [vmem:[%s0 + $0xb0] sm:$0xf]
  %v63 = vld [vmem:[%s0 + $0xb4] sm:$0xf]
  %v64 = vld [vmem:[%s0 + $0xb8] sm:$0xf]
  %v65 = vld [vmem:[%s0 + $0xbc] sm:$0xf]
  %v66 = vld [vmem:[%s0 + $0xc0] sm:$0xf]
  %v67 = vld [vmem:[%s0 + $0xc4] sm:$0xf]
  %v68 = vld [vmem:[%s0 + $0xc8] sm:$0xf]
  %v69 = vld [vmem:[%s0 + $0xcc] sm:$0xf]
  %v70 = vld [vmem:[%s0 + $0xd0] sm:$0xf]
  %v71 = vld [vmem:[%s0 + $0xd4] sm:$0xf]
  %v72 = vld [vmem:[%s0 + $0xd8] sm:$0xf]
  %v73 = vld [vmem:[%s0 + $0xdc] sm:$0xf]
  %v74 = vld [vmem:[%s0 + $0xe0] sm:$0xf]
  %v75 = vld [vmem:[%s0 + $0xe4] sm:$0xf]
  %v76 = vld [vmem:[%s0 + $0xe8] sm:$0xf]
  %v77 = vld [vmem:[%s0 + $0xec] sm:$0xf]
  %v78 = vld [vmem:[%s0 + $0xf0] sm:$0xf]
  %v79 = vld [vmem:[%s0 + $0xf4] sm:$0xf]
  %v80 = vld [vmem:[%s0 + $0xf8] sm:$0xf]
  %v81 = vld [vmem:[%s0 + $0xfc] sm:$0xf]
  %v82 = vld [vmem:[%s2] sm:$0x3]
  %v83 = vld [vmem:[%s1] sm:$0xf]
  %v84 = vld [vmem:[%s1 + $0x4] sm:$0xf]
  %v85 = vld [vmem:[%s1 + $0x8] sm:$0xf]
  %v86 = vld [vmem:[%s1 + $0xc] sm:$0xf]
  %v87 = vld [vmem:[%s1 + $0x10] sm:$0xf]
  %v88 = vld [vmem:[%s1 + $0x14] sm:$0xf]
  %v89 = vld [vmem:[%s1 + $0x18] sm:$0xf]
  %v90 = vld [vmem:[%s1 + $0x1c] sm:$0xf]
  %v91 = vld [vmem:[%s1 + $0x20] sm:$0xf]
  %v92 = vld [vmem:[%s1 + $0x24] sm:$0xf]
  %v93 = vld [vmem:[%s1 + $0x28] sm:$0xf]
  %v94 = vld [vmem:[%s1 + $0x2c] sm:$0xf]
  %v95 = vld [vmem:[%s1 + $0x30] sm:$0xf]
  %v96 = vld [vmem:[%s1 + $0x34] sm:$0xf]
  %v97 = vld [vmem:[%s1 + $0x38] sm:$0xf]
  %v98 = vld [vmem:[%s1 + $0x3c] sm:$0xf]
  %v99 = vld [vmem:[%s1 + $0x40] sm:$0xf]
  %v100 = vld [vmem:[%s1 + $0x44] sm:$0xf]
  %v101 = vld [vmem:[%s1 + $0x48] sm:$0xf]
  %v102 = vld [vmem:[%s1 + $0x4c] sm:$0xf]
  %v103 = vld [vmem:[%s1 + $0x50] sm:$0xf]
  %v104 = vld [vmem:[%s1 + $0x54] sm:$0xf]
  %v105 = vld [vmem:[%s1 + $0x58] sm:$0xf]
  %v106 = vld [vmem:[%s1 + $0x5c] sm:$0xf]
  %v107 = vld [vmem:[%s1 + $0x60] sm:$0xf]
  %v108 = vld [vmem:[%s1 + $0x64] sm:$0xf]
  %v109 = vld [vmem:[%s1 + $0x68] sm:$0xf]
  %v110 = vld [vmem:[%s1 + $0x6c] sm:$0xf]
  %v111 = vld [vmem:[%s1 + $0x70] sm:$0xf]
  %v112 = vld [vmem:[%s1 + $0x74] sm:$0xf]
  %v113 = vld [vmem:[%s1 + $0x78] sm:$0xf]
  %v114 = vld [vmem:[%s1 + $0x7c] sm:$0xf]
  %v115 = vld [vmem:[%s1 + $0x80] sm:$0xf]
  %v116 = vld [vmem:[%s1 + $0x84] sm:$0xf]
  %v117 = vld [vmem:[%s1 + $0x88] sm:$0xf]
  %v118 = vld [vmem:[%s1 + $0x8c] sm:$0xf]
  %v119 = vld [vmem:[%s1 + $0x90] sm:$0xf]
  %v120 = vld [vmem:[%s1 + $0x94] sm:$0xf]
  %v121 = vld [vmem:[%s1 + $0x98] sm:$0xf]
  %v122 = vld [vmem:[%s1 + $0x9c] sm:$0xf]
  %v123 = vld [vmem:[%s1 + $0xa0] sm:$0xf]
  %v124 = vld [vmem:[%s1 + $0xa4] sm:$0xf]
  %v125 = vld [vmem:[%s1 + $0xa8] sm:$0xf]
  %v126 = vld [vmem:[%s1 + $0xac] sm:$0xf]
  %v127 = vld [vmem:[%s1 + $0xb0] sm:$0xf]
  %v128 = vld [vmem:[%s1 + $0xb4] sm:$0xf]
  %v129 = vld [vmem:[%s1 + $0xb8] sm:$0xf]
  %v130 = vld [vmem:[%s1 + $0xbc] sm:$0xf]
  %v131 = vld [vmem:[%s1 + $0xc0] sm:$0xf]
  %v132 = vld [vmem:[%s1 + $0xc4] sm:$0xf]
  %v133 = vld [vmem:[%s1 + $0xc8] sm:$0xf]
  %v134 = vld [vmem:[%s1 + $0xcc] sm:$0xf]
  %v135 = vld [vmem:[%s1 + $0xd0] sm:$0xf]
  %v136 = vld [vmem:[%s1 + $0xd4] sm:$0xf]
  %v137 = vld [vmem:[%s1 + $0xd8] sm:$0xf]
  %v138 = vld [vmem:[%s1 + $0xdc] sm:$0xf]
  %v139 = vld [vmem:[%s1 + $0xe0] sm:$0xf]
  %v140 = vld [vmem:[%s1 + $0xe4] sm:$0xf]
  %v141 = vld [vmem:[%s1 + $0xe8] sm:$0xf]
  %v142 = vld [vmem:[%s1 + $0xec] sm:$0xf]
  %v143 = vld [vmem:[%s1 + $0xf0] sm:$0xf]
  %v144 = vld [vmem:[%s1 + $0xf4] sm:$0xf]
  %v145 = vld [vmem:[%s1 + $0xf8] sm:$0xf]
  %v146 = vld [vmem:[%s1 + $0xfc] sm:$0xf]
  %v147 = vunpack.c.l.bf16 %v83
  %v148 = vunpack.c.l.bf16 %v84
  %v149 = vunpack.c.l.bf16 %v85
  %v150 = vunpack.c.l.bf16 %v86
  %v151 = vunpack.c.l.bf16 %v87
  %v152 = vunpack.c.l.bf16 %v88
  %v153 = vunpack.c.l.bf16 %v89
  %v154 = vunpack.c.l.bf16 %v90
  %v155 = vunpack.c.l.bf16 %v91
  %v156 = vunpack.c.l.bf16 %v92
  %v157 = vunpack.c.l.bf16 %v93
  %v158 = vunpack.c.l.bf16 %v94
  %v159 = vunpack.c.l.bf16 %v95
  %v160 = vunpack.c.l.bf16 %v96
  %v161 = vunpack.c.l.bf16 %v97
  %v162 = vunpack.c.l.bf16 %v98
  %v163 = vunpack.c.l.bf16 %v99
  %v164 = vunpack.c.l.bf16 %v100
  %v165 = vunpack.c.l.bf16 %v101
  %v166 = vunpack.c.l.bf16 %v102
  %v167 = vunpack.c.l.bf16 %v103
  %v168 = vunpack.c.l.bf16 %v104
  %v169 = vunpack.c.l.bf16 %v105
  %v170 = vunpack.c.l.bf16 %v106
  %v171 = vunpack.c.l.bf16 %v107
  %v172 = vunpack.c.l.bf16 %v108
  %v173 = vunpack.c.l.bf16 %v109
  %v174 = vunpack.c.l.bf16 %v110
  %v175 = vunpack.c.l.bf16 %v111
  %v176 = vunpack.c.l.bf16 %v112
  %v177 = vunpack.c.l.bf16 %v113
  %v178 = vunpack.c.l.bf16 %v114
  %v179 = vunpack.c.l.bf16 %v115
  %v180 = vunpack.c.l.bf16 %v116
  %v181 = vunpack.c.l.bf16 %v117
  %v182 = vunpack.c.l.bf16 %v118
  %v183 = vunpack.c.l.bf16 %v119
  %v184 = vunpack.c.l.bf16 %v120
  %v185 = vunpack.c.l.bf16 %v121
  %v186 = vunpack.c.l.bf16 %v122
  %v187 = vunpack.c.l.bf16 %v123
  %v188 = vunpack.c.l.bf16 %v124
  %v189 = vunpack.c.l.bf16 %v125
  %v190 = vunpack.c.l.bf16 %v126
  %v191 = vunpack.c.l.bf16 %v127
  %v192 = vunpack.c.l.bf16 %v128
  %v193 = vunpack.c.l.bf16 %v129
  %v194 = vunpack.c.l.bf16 %v130
  %v195 = vunpack.c.l.bf16 %v131
  %v196 = vunpack.c.l.bf16 %v132
  %v197 = vunpack.c.l.bf16 %v133
  %v198 = vunpack.c.l.bf16 %v134
  %v199 = vunpack.c.l.bf16 %v135
  %v200 = vunpack.c.l.bf16 %v136
  %v201 = vunpack.c.l.bf16 %v137
  %v202 = vunpack.c.l.bf16 %v138
  %v203 = vunpack.c.l.bf16 %v139
  %v204 = vunpack.c.l.bf16 %v140
  %v205 = vunpack.c.l.bf16 %v141
  %v206 = vunpack.c.l.bf16 %v142
  %v207 = vunpack.c.l.bf16 %v143
  %v208 = vunpack.c.l.bf16 %v144
  %v209 = vunpack.c.l.bf16 %v145
  %v210 = vunpack.c.l.bf16 %v146
  %v275 = vunpack.c.l.b16 %v18
  %v276 = vunpack.c.l.b16 %v19
  %v277 = vunpack.c.l.b16 %v20
  %v278 = vunpack.c.l.b16 %v21
  %v279 = vunpack.c.l.b16 %v22
  %v280 = vunpack.c.l.b16 %v23
  %v281 = vunpack.c.l.b16 %v24
  %v282 = vunpack.c.l.b16 %v25
  %v283 = vunpack.c.l.b16 %v26
  %v284 = vunpack.c.l.b16 %v27
  %v285 = vunpack.c.l.b16 %v28
  %v286 = vunpack.c.l.b16 %v29
  %v287 = vunpack.c.l.b16 %v30
  %v288 = vunpack.c.l.b16 %v31
  %v289 = vunpack.c.l.b16 %v32
  %v290 = vunpack.c.l.b16 %v33
  %v291 = vunpack.c.l.b16 %v34
  %v292 = vunpack.c.l.b16 %v35
  %v293 = vunpack.c.l.b16 %v36
  %v294 = vunpack.c.l.b16 %v37
  %v295 = vunpack.c.l.b16 %v38
  %v296 = vunpack.c.l.b16 %v39
  %v297 = vunpack.c.l.b16 %v40
  %v298 = vunpack.c.l.b16 %v41
  %v299 = vunpack.c.l.b16 %v42
  %v300 = vunpack.c.l.b16 %v43
  %v301 = vunpack.c.l.b16 %v44
  %v302 = vunpack.c.l.b16 %v45
  %v303 = vunpack.c.l.b16 %v46
  %v304 = vunpack.c.l.b16 %v47
  %v305 = vunpack.c.l.b16 %v48
  %v306 = vunpack.c.l.b16 %v49
  %v307 = vunpack.c.l.b16 %v50
  %v308 = vunpack.c.l.b16 %v51
  %v309 = vunpack.c.l.b16 %v52
  %v310 = vunpack.c.l.b16 %v53
  %v311 = vunpack.c.l.b16 %v54
  %v312 = vunpack.c.l.b16 %v55
  %v313 = vunpack.c.l.b16 %v56
  %v314 = vunpack.c.l.b16 %v57
  %v315 = vunpack.c.l.b16 %v58
  %v316 = vunpack.c.l.b16 %v59
  %v317 = vunpack.c.l.b16 %v60
  %v318 = vunpack.c.l.b16 %v61
  %v319 = vunpack.c.l.b16 %v62
  %v320 = vunpack.c.l.b16 %v63
  %v321 = vunpack.c.l.b16 %v64
  %v322 = vunpack.c.l.b16 %v65
  %v323 = vunpack.c.l.b16 %v66
  %v324 = vunpack.c.l.b16 %v67
  %v325 = vunpack.c.l.b16 %v68
  %v326 = vunpack.c.l.b16 %v69
  %v327 = vunpack.c.l.b16 %v70
  %v328 = vunpack.c.l.b16 %v71
  %v329 = vunpack.c.l.b16 %v72
  %v330 = vunpack.c.l.b16 %v73
  %v331 = vunpack.c.l.b16 %v74
  %v332 = vunpack.c.l.b16 %v75
  %v333 = vunpack.c.l.b16 %v76
  %v334 = vunpack.c.l.b16 %v77
  %v335 = vunpack.c.l.b16 %v78
  %v336 = vunpack.c.l.b16 %v79
  %v337 = vunpack.c.l.b16 %v80
  %v338 = vunpack.c.l.b16 %v81
  %v339 = vpack.c.b16 %v276, %v275
  %v340 = vpack.c.b16 %v278, %v277
  %v341 = vpack.c.b16 %v280, %v279
  %v342 = vpack.c.b16 %v282, %v281
  %v343 = vpack.c.b16 %v284, %v283
  %v344 = vpack.c.b16 %v286, %v285
  %v345 = vpack.c.b16 %v288, %v287
  %v346 = vpack.c.b16 %v290, %v289
  %v347 = vpack.c.b16 %v292, %v291
  %v348 = vpack.c.b16 %v294, %v293
  %v349 = vpack.c.b16 %v296, %v295
  %v350 = vpack.c.b16 %v298, %v297
  %v351 = vpack.c.b16 %v300, %v299
  %v352 = vpack.c.b16 %v302, %v301
  %v353 = vpack.c.b16 %v304, %v303
  %v354 = vpack.c.b16 %v306, %v305
  %v355 = vpack.c.b16 %v308, %v307
  %v356 = vpack.c.b16 %v310, %v309
  %v357 = vpack.c.b16 %v312, %v311
  %v358 = vpack.c.b16 %v314, %v313
  %v359 = vpack.c.b16 %v316, %v315
  %v360 = vpack.c.b16 %v318, %v317
  %v361 = vpack.c.b16 %v320, %v319
  %v362 = vpack.c.b16 %v322, %v321
  %v363 = vpack.c.b16 %v324, %v323
  %v364 = vpack.c.b16 %v326, %v325
  %v365 = vpack.c.b16 %v328, %v327
  %v366 = vpack.c.b16 %v330, %v329
  %v367 = vpack.c.b16 %v332, %v331
  %v368 = vpack.c.b16 %v334, %v333
  %v369 = vpack.c.b16 %v336, %v335
  %v370 = vpack.c.b16 %v338, %v337
  %vm371 = vcmask 31744
  %v373 = vsel %vm371, %v339, 0
  %v376 = vsel %vm371, %v340, 0
  %v379 = vsel %vm371, %v341, 0
  %v382 = vsel %vm371, %v342, 0
  %v385 = vsel %vm371, %v343, 0
  %v388 = vsel %vm371, %v344, 0
  %v391 = vsel %vm371, %v345, 0
  %v394 = vsel %vm371, %v346, 0
  %v397 = vsel %vm371, %v347, 0
  %v400 = vsel %vm371, %v348, 0
  %v403 = vsel %vm371, %v349, 0
  %v406 = vsel %vm371, %v350, 0
  %v409 = vsel %vm371, %v351, 0
  %v412 = vsel %vm371, %v352, 0
  %v415 = vsel %vm371, %v353, 0
  %v418 = vsel %vm371, %v354, 0
  %v421 = vsel %vm371, %v355, 0
  %v424 = vsel %vm371, %v356, 0
  %v427 = vsel %vm371, %v357, 0
  %v430 = vsel %vm371, %v358, 0
  %v433 = vsel %vm371, %v359, 0
  %v436 = vsel %vm371, %v360, 0
  %v439 = vsel %vm371, %v361, 0
  %v442 = vsel %vm371, %v362, 0
  %v445 = vsel %vm371, %v363, 0
  %v448 = vsel %vm371, %v364, 0
  %v451 = vsel %vm371, %v365, 0
  %v454 = vsel %vm371, %v366, 0
  %v457 = vsel %vm371, %v367, 0
  %v460 = vsel %vm371, %v368, 0
  %v463 = vsel %vm371, %v369, 0
  %v466 = vsel %vm371, %v370, 0
  %vm468 = vcmask 1041408
  %v470 = vsel %vm468, %v82, 0
  %472 = vmatpush.bf16.msra.mxu0 0
  %473 = vmatpush.bf16.msra.mxu0 0
  %474 = vmatpush.bf16.msra.mxu0 0
  %475 = vmatpush.bf16.msra.mxu0 0
  %476 = vmatpush.bf16.msra.mxu0 0
  %477 = vmatpush.bf16.msra.mxu0 0
  %478 = vmatpush.bf16.msra.mxu0 0
  %479 = vmatpush.bf16.msra.mxu0 %v470
  %480 = vmatmul.bf16.gmra.mxu0 %v373
  %v481 = vpop.f32.mrf.mxu0
  %v482 = vadd.f32 %v147, %v481
  %v483 = vpop.f32.mrf.mxu0
  %v484 = vadd.f32 %v148, %v483
  %485 = vmatmul.bf16.gmra.mxu0 %v376
  %v486 = vpop.f32.mrf.mxu0
  %v487 = vadd.f32 %v149, %v486
  %v488 = vpop.f32.mrf.mxu0
  %v489 = vadd.f32 %v150, %v488
  %490 = vmatmul.bf16.gmra.mxu0 %v379
  %v491 = vpop.f32.mrf.mxu0
  %v492 = vadd.f32 %v151, %v491
  %v493 = vpop.f32.mrf.mxu0
  %v494 = vadd.f32 %v152, %v493
  %495 = vmatmul.bf16.gmra.mxu0 %v382
  %v496 = vpop.f32.mrf.mxu0
  %v497 = vadd.f32 %v153, %v496
  %v498 = vpop.f32.mrf.mxu0
  %v499 = vadd.f32 %v154, %v498
  %500 = vmatmul.bf16.gmra.mxu0 %v385
  %v501 = vpop.f32.mrf.mxu0
  %v502 = vadd.f32 %v155, %v501
  %v503 = vpop.f32.mrf.mxu0
  %v504 = vadd.f32 %v156, %v503
  %505 = vmatmul.bf16.gmra.mxu0 %v388
  %v506 = vpop.f32.mrf.mxu0
  %v507 = vadd.f32 %v157, %v506
  %v508 = vpop.f32.mrf.mxu0
  %v509 = vadd.f32 %v158, %v508
  %510 = vmatmul.bf16.gmra.mxu0 %v391
  %v511 = vpop.f32.mrf.mxu0
  %v512 = vadd.f32 %v159, %v511
  %v513 = vpop.f32.mrf.mxu0
  %v514 = vadd.f32 %v160, %v513
  %515 = vmatmul.bf16.gmra.mxu0 %v394
  %v516 = vpop.f32.mrf.mxu0
  %v517 = vadd.f32 %v161, %v516
  %v518 = vpop.f32.mrf.mxu0
  %v519 = vadd.f32 %v162, %v518
  %520 = vmatmul.bf16.gmra.mxu0 %v397
  %v521 = vpop.f32.mrf.mxu0
  %v522 = vadd.f32 %v163, %v521
  %v523 = vpop.f32.mrf.mxu0
  %v524 = vadd.f32 %v164, %v523
  %525 = vmatmul.bf16.gmra.mxu0 %v400
  %v526 = vpop.f32.mrf.mxu0
  %v527 = vadd.f32 %v165, %v526
  %v528 = vpop.f32.mrf.mxu0
  %v529 = vadd.f32 %v166, %v528
  %530 = vmatmul.bf16.gmra.mxu0 %v403
  %v531 = vpop.f32.mrf.mxu0
  %v532 = vadd.f32 %v167, %v531
  %v533 = vpop.f32.mrf.mxu0
  %v534 = vadd.f32 %v168, %v533
  %535 = vmatmul.bf16.gmra.mxu0 %v406
  %v536 = vpop.f32.mrf.mxu0
  %v537 = vadd.f32 %v169, %v536
  %v538 = vpop.f32.mrf.mxu0
  %v539 = vadd.f32 %v170, %v538
  %540 = vmatmul.bf16.gmra.mxu0 %v409
  %v541 = vpop.f32.mrf.mxu0
  %v542 = vadd.f32 %v171, %v541
  %v543 = vpop.f32.mrf.mxu0
  %v544 = vadd.f32 %v172, %v543
  %545 = vmatmul.bf16.gmra.mxu0 %v412
  %v546 = vpop.f32.mrf.mxu0
  %v547 = vadd.f32 %v173, %v546
  %v548 = vpop.f32.mrf.mxu0
  %v549 = vadd.f32 %v174, %v548
  %550 = vmatmul.bf16.gmra.mxu0 %v415
  %v551 = vpop.f32.mrf.mxu0
  %v552 = vadd.f32 %v175, %v551
  %v553 = vpop.f32.mrf.mxu0
  %v554 = vadd.f32 %v176, %v553
  %555 = vmatmul.bf16.gmra.mxu0 %v418
  %v556 = vpop.f32.mrf.mxu0
  %v557 = vadd.f32 %v177, %v556
  %v558 = vpop.f32.mrf.mxu0
  %v559 = vadd.f32 %v178, %v558
  %560 = vmatmul.bf16.gmra.mxu0 %v421
  %v561 = vpop.f32.mrf.mxu0
  %v562 = vadd.f32 %v179, %v561
  %v563 = vpop.f32.mrf.mxu0
  %v564 = vadd.f32 %v180, %v563
  %565 = vmatmul.bf16.gmra.mxu0 %v424
  %v566 = vpop.f32.mrf.mxu0
  %v567 = vadd.f32 %v181, %v566
  %v568 = vpop.f32.mrf.mxu0
  %v569 = vadd.f32 %v182, %v568
  %570 = vmatmul.bf16.gmra.mxu0 %v427
  %v571 = vpop.f32.mrf.mxu0
  %v572 = vadd.f32 %v183, %v571
  %v573 = vpop.f32.mrf.mxu0
  %v574 = vadd.f32 %v184, %v573
  %575 = vmatmul.bf16.gmra.mxu0 %v430
  %v576 = vpop.f32.mrf.mxu0
  %v577 = vadd.f32 %v185, %v576
  %v578 = vpop.f32.mrf.mxu0
  %v579 = vadd.f32 %v186, %v578
  %580 = vmatmul.bf16.gmra.mxu0 %v433
  %v581 = vpop.f32.mrf.mxu0
  %v582 = vadd.f32 %v187, %v581
  %v583 = vpop.f32.mrf.mxu0
  %v584 = vadd.f32 %v188, %v583
  %585 = vmatmul.bf16.gmra.mxu0 %v436
  %v586 = vpop.f32.mrf.mxu0
  %v587 = vadd.f32 %v189, %v586
  %v588 = vpop.f32.mrf.mxu0
  %v589 = vadd.f32 %v190, %v588
  %590 = vmatmul.bf16.gmra.mxu0 %v439
  %v591 = vpop.f32.mrf.mxu0
  %v592 = vadd.f32 %v191, %v591
  %v593 = vpop.f32.mrf.mxu0
  %v594 = vadd.f32 %v192, %v593
  %595 = vmatmul.bf16.gmra.mxu0 %v442
  %v596 = vpop.f32.mrf.mxu0
  %v597 = vadd.f32 %v193, %v596
  %v598 = vpop.f32.mrf.mxu0
  %v599 = vadd.f32 %v194, %v598
  %600 = vmatmul.bf16.gmra.mxu0 %v445
  %v601 = vpop.f32.mrf.mxu0
  %v602 = vadd.f32 %v195, %v601
  %v603 = vpop.f32.mrf.mxu0
  %v604 = vadd.f32 %v196, %v603
  %605 = vmatmul.bf16.gmra.mxu0 %v448
  %v606 = vpop.f32.mrf.mxu0
  %v607 = vadd.f32 %v197, %v606
  %v608 = vpop.f32.mrf.mxu0
  %v609 = vadd.f32 %v198, %v608
  %610 = vmatmul.bf16.gmra.mxu0 %v451
  %v611 = vpop.f32.mrf.mxu0
  %v612 = vadd.f32 %v199, %v611
  %v613 = vpop.f32.mrf.mxu0
  %v614 = vadd.f32 %v200, %v613
  %615 = vmatmul.bf16.gmra.mxu0 %v454
  %v616 = vpop.f32.mrf.mxu0
  %v617 = vadd.f32 %v201, %v616
  %v618 = vpop.f32.mrf.mxu0
  %v619 = vadd.f32 %v202, %v618
  %620 = vmatmul.bf16.gmra.mxu0 %v457
  %v621 = vpop.f32.mrf.mxu0
  %v622 = vadd.f32 %v203, %v621
  %v623 = vpop.f32.mrf.mxu0
  %v624 = vadd.f32 %v204, %v623
  %625 = vmatmul.bf16.gmra.mxu0 %v460
  %v626 = vpop.f32.mrf.mxu0
  %v627 = vadd.f32 %v205, %v626
  %v628 = vpop.f32.mrf.mxu0
  %v629 = vadd.f32 %v206, %v628
  %630 = vmatmul.bf16.gmra.mxu0 %v463
  %v631 = vpop.f32.mrf.mxu0
  %v632 = vadd.f32 %v207, %v631
  %v633 = vpop.f32.mrf.mxu0
  %v634 = vadd.f32 %v208, %v633
  %635 = vmatmul.bf16.gmra.mxu0 %v466
  %v636 = vpop.f32.mrf.mxu0
  %v637 = vadd.f32 %v209, %v636
  %v638 = vpop.f32.mrf.mxu0
  %v639 = vadd.f32 %v210, %v638
  %640 = vdwg.mxu0
  %v641 = vld [vmem:[%s3] sm:$0x1]
  %v643 = vperm.slane %v641, 0
  %v645 = vadd.f32 %v482, %v643
  %v646 = vadd.f32 %v484, %v643
  %v647 = vadd.f32 %v487, %v643
  %v648 = vadd.f32 %v489, %v643
  %v649 = vadd.f32 %v492, %v643
  %v650 = vadd.f32 %v494, %v643
  %v651 = vadd.f32 %v497, %v643
  %v652 = vadd.f32 %v499, %v643
  %v653 = vadd.f32 %v502, %v643
  %v654 = vadd.f32 %v504, %v643
  %v655 = vadd.f32 %v507, %v643
  %v656 = vadd.f32 %v509, %v643
  %v657 = vadd.f32 %v512, %v643
  %v658 = vadd.f32 %v514, %v643
  %v659 = vadd.f32 %v517, %v643
  %v660 = vadd.f32 %v519, %v643
  %v661 = vadd.f32 %v522, %v643
  %v662 = vadd.f32 %v524, %v643
  %v663 = vadd.f32 %v527, %v643
  %v664 = vadd.f32 %v529, %v643
  %v665 = vadd.f32 %v532, %v643
  %v666 = vadd.f32 %v534, %v643
  %v667 = vadd.f32 %v537, %v643
  %v668 = vadd.f32 %v539, %v643
  %v669 = vadd.f32 %v542, %v643
  %v670 = vadd.f32 %v544, %v643
  %v671 = vadd.f32 %v547, %v643
  %v672 = vadd.f32 %v549, %v643
  %v673 = vadd.f32 %v552, %v643
  %v674 = vadd.f32 %v554, %v643
  %v675 = vadd.f32 %v557, %v643
  %v676 = vadd.f32 %v559, %v643
  %v677 = vadd.f32 %v562, %v643
  %v678 = vadd.f32 %v564, %v643
  %v679 = vadd.f32 %v567, %v643
  %v680 = vadd.f32 %v569, %v643
  %v681 = vadd.f32 %v572, %v643
  %v682 = vadd.f32 %v574, %v643
  %v683 = vadd.f32 %v577, %v643
  %v684 = vadd.f32 %v579, %v643
  %v685 = vadd.f32 %v582, %v643
  %v686 = vadd.f32 %v584, %v643
  %v687 = vadd.f32 %v587, %v643
  %v688 = vadd.f32 %v589, %v643
  %v689 = vadd.f32 %v592, %v643
  %v690 = vadd.f32 %v594, %v643
  %v691 = vadd.f32 %v597, %v643
  %v692 = vadd.f32 %v599, %v643
  %v693 = vadd.f32 %v602, %v643
  %v694 = vadd.f32 %v604, %v643
  %v695 = vadd.f32 %v607, %v643
  %v696 = vadd.f32 %v609, %v643
  %v697 = vadd.f32 %v612, %v643
  %v698 = vadd.f32 %v614, %v643
  %v699 = vadd.f32 %v617, %v643
  %v700 = vadd.f32 %v619, %v643
  %v701 = vadd.f32 %v622, %v643
  %v702 = vadd.f32 %v624, %v643
  %v703 = vadd.f32 %v627, %v643
  %v704 = vadd.f32 %v629, %v643
  %v705 = vadd.f32 %v632, %v643
  %v706 = vadd.f32 %v634, %v643
  %v707 = vadd.f32 %v637, %v643
  %v708 = vadd.f32 %v639, %v643
  %v709 = vmax.f32 %v645, 0.0
  %v710 = vmax.f32 %v646, 0.0
  %v711 = vmax.f32 %v647, 0.0
  %v712 = vmax.f32 %v648, 0.0
  %v713 = vmax.f32 %v649, 0.0
  %v714 = vmax.f32 %v650, 0.0
  %v715 = vmax.f32 %v651, 0.0
  %v716 = vmax.f32 %v652, 0.0
  %v717 = vmax.f32 %v653, 0.0
  %v718 = vmax.f32 %v654, 0.0
  %v719 = vmax.f32 %v655, 0.0
  %v720 = vmax.f32 %v656, 0.0
  %v721 = vmax.f32 %v657, 0.0
  %v722 = vmax.f32 %v658, 0.0
  %v723 = vmax.f32 %v659, 0.0
  %v724 = vmax.f32 %v660, 0.0
  %v725 = vmax.f32 %v661, 0.0
  %v726 = vmax.f32 %v662, 0.0
  %v727 = vmax.f32 %v663, 0.0
  %v728 = vmax.f32 %v664, 0.0
  %v729 = vmax.f32 %v665, 0.0
  %v730 = vmax.f32 %v666, 0.0
  %v731 = vmax.f32 %v667, 0.0
  %v732 = vmax.f32 %v668, 0.0
  %v733 = vmax.f32 %v669, 0.0
  %v734 = vmax.f32 %v670, 0.0
  %v735 = vmax.f32 %v671, 0.0
  %v736 = vmax.f32 %v672, 0.0
  %v737 = vmax.f32 %v673, 0.0
  %v738 = vmax.f32 %v674, 0.0
  %v739 = vmax.f32 %v675, 0.0
  %v740 = vmax.f32 %v676, 0.0
  %v741 = vmax.f32 %v677, 0.0
  %v742 = vmax.f32 %v678, 0.0
  %v743 = vmax.f32 %v679, 0.0
  %v744 = vmax.f32 %v680, 0.0
  %v745 = vmax.f32 %v681, 0.0
  %v746 = vmax.f32 %v682, 0.0
  %v747 = vmax.f32 %v683, 0.0
  %v748 = vmax.f32 %v684, 0.0
  %v749 = vmax.f32 %v685, 0.0
  %v750 = vmax.f32 %v686, 0.0
  %v751 = vmax.f32 %v687, 0.0
  %v752 = vmax.f32 %v688, 0.0
  %v753 = vmax.f32 %v689, 0.0
  %v754 = vmax.f32 %v690, 0.0
  %v755 = vmax.f32 %v691, 0.0
  %v756 = vmax.f32 %v692, 0.0
  %v757 = vmax.f32 %v693, 0.0
  %v758 = vmax.f32 %v694, 0.0
  %v759 = vmax.f32 %v695, 0.0
  %v760 = vmax.f32 %v696, 0.0
  %v761 = vmax.f32 %v697, 0.0
  %v762 = vmax.f32 %v698, 0.0
  %v763 = vmax.f32 %v699, 0.0
  %v764 = vmax.f32 %v700, 0.0
  %v765 = vmax.f32 %v701, 0.0
  %v766 = vmax.f32 %v702, 0.0
  %v767 = vmax.f32 %v703, 0.0
  %v768 = vmax.f32 %v704, 0.0
  %v769 = vmax.f32 %v705, 0.0
  %v770 = vmax.f32 %v706, 0.0
  %v771 = vmax.f32 %v707, 0.0
  %v772 = vmax.f32 %v708, 0.0
  %v773 = vpack.c.bf16 %v709, %v709
  %v774 = vpack.c.bf16 %v710, %v710
  %v775 = vpack.c.bf16 %v711, %v711
  %v776 = vpack.c.bf16 %v712, %v712
  %v777 = vpack.c.bf16 %v713, %v713
  %v778 = vpack.c.bf16 %v714, %v714
  %v779 = vpack.c.bf16 %v715, %v715
  %v780 = vpack.c.bf16 %v716, %v716
  %v781 = vpack.c.bf16 %v717, %v717
  %v782 = vpack.c.bf16 %v718, %v718
  %v783 = vpack.c.bf16 %v719, %v719
  %v784 = vpack.c.bf16 %v720, %v720
  %v785 = vpack.c.bf16 %v721, %v721
  %v786 = vpack.c.bf16 %v722, %v722
  %v787 = vpack.c.bf16 %v723, %v723
  %v788 = vpack.c.bf16 %v724, %v724
  %v789 = vpack.c.bf16 %v725, %v725
  %v790 = vpack.c.bf16 %v726, %v726
  %v791 = vpack.c.bf16 %v727, %v727
  %v792 = vpack.c.bf16 %v728, %v728
  %v793 = vpack.c.bf16 %v729, %v729
  %v794 = vpack.c.bf16 %v730, %v730
  %v795 = vpack.c.bf16 %v731, %v731
  %v796 = vpack.c.bf16 %v732, %v732
  %v797 = vpack.c.bf16 %v733, %v733
  %v798 = vpack.c.bf16 %v734, %v734
  %v799 = vpack.c.bf16 %v735, %v735
  %v800 = vpack.c.bf16 %v736, %v736
  %v801 = vpack.c.bf16 %v737, %v737
  %v802 = vpack.c.bf16 %v738, %v738
  %v803 = vpack.c.bf16 %v739, %v739
  %v804 = vpack.c.bf16 %v740, %v740
  %v805 = vpack.c.bf16 %v741, %v741
  %v806 = vpack.c.bf16 %v742, %v742
  %v807 = vpack.c.bf16 %v743, %v743
  %v808 = vpack.c.bf16 %v744, %v744
  %v809 = vpack.c.bf16 %v745, %v745
  %v810 = vpack.c.bf16 %v746, %v746
  %v811 = vpack.c.bf16 %v747, %v747
  %v812 = vpack.c.bf16 %v748, %v748
  %v813 = vpack.c.bf16 %v749, %v749
  %v814 = vpack.c.bf16 %v750, %v750
  %v815 = vpack.c.bf16 %v751, %v751
  %v816 = vpack.c.bf16 %v752, %v752
  %v817 = vpack.c.bf16 %v753, %v753
  %v818 = vpack.c.bf16 %v754, %v754
  %v819 = vpack.c.bf16 %v755, %v755
  %v820 = vpack.c.bf16 %v756, %v756
  %v821 = vpack.c.bf16 %v757, %v757
  %v822 = vpack.c.bf16 %v758, %v758
  %v823 = vpack.c.bf16 %v759, %v759
  %v824 = vpack.c.bf16 %v760, %v760
  %v825 = vpack.c.bf16 %v761, %v761
  %v826 = vpack.c.bf16 %v762, %v762
  %v827 = vpack.c.bf16 %v763, %v763
  %v828 = vpack.c.bf16 %v764, %v764
  %v829 = vpack.c.bf16 %v765, %v765
  %v830 = vpack.c.bf16 %v766, %v766
  %v831 = vpack.c.bf16 %v767, %v767
  %v832 = vpack.c.bf16 %v768, %v768
  %v833 = vpack.c.bf16 %v769, %v769
  %v834 = vpack.c.bf16 %v770, %v770
  %v835 = vpack.c.bf16 %v771, %v771
  %v836 = vpack.c.bf16 %v772, %v772
  %vm837 = vcmask 257024
  %838 = vst.msk [vmem:[%s4] sm:$0xf] %vm837, %v773
  %839 = vst.msk [vmem:[%s4 + $0x4] sm:$0xf] %vm837, %v774
  %840 = vst.msk [vmem:[%s4 + $0x8] sm:$0xf] %vm837, %v775
  %841 = vst.msk [vmem:[%s4 + $0xc] sm:$0xf] %vm837, %v776
  %842 = vst.msk [vmem:[%s4 + $0x10] sm:$0xf] %vm837, %v777
  %843 = vst.msk [vmem:[%s4 + $0x14] sm:$0xf] %vm837, %v778
  %844 = vst.msk [vmem:[%s4 + $0x18] sm:$0xf] %vm837, %v779
  %845 = vst.msk [vmem:[%s4 + $0x1c] sm:$0xf] %vm837, %v780
  %846 = vst.msk [vmem:[%s4 + $0x20] sm:$0xf] %vm837, %v781
  %847 = vst.msk [vmem:[%s4 + $0x24] sm:$0xf] %vm837, %v782
  %848 = vst.msk [vmem:[%s4 + $0x28] sm:$0xf] %vm837, %v783
  %849 = vst.msk [vmem:[%s4 + $0x2c] sm:$0xf] %vm837, %v784
  %850 = vst.msk [vmem:[%s4 + $0x30] sm:$0xf] %vm837, %v785
  %851 = vst.msk [vmem:[%s4 + $0x34] sm:$0xf] %vm837, %v786
  %852 = vst.msk [vmem:[%s4 + $0x38] sm:$0xf] %vm837, %v787
  %853 = vst.msk [vmem:[%s4 + $0x3c] sm:$0xf] %vm837, %v788
  %854 = vst.msk [vmem:[%s4 + $0x40] sm:$0xf] %vm837, %v789
  %855 = vst.msk [vmem:[%s4 + $0x44] sm:$0xf] %vm837, %v790
  %856 = vst.msk [vmem:[%s4 + $0x48] sm:$0xf] %vm837, %v791
  %857 = vst.msk [vmem:[%s4 + $0x4c] sm:$0xf] %vm837, %v792
  %858 = vst.msk [vmem:[%s4 + $0x50] sm:$0xf] %vm837, %v793
  %859 = vst.msk [vmem:[%s4 + $0x54] sm:$0xf] %vm837, %v794
  %860 = vst.msk [vmem:[%s4 + $0x58] sm:$0xf] %vm837, %v795
  %861 = vst.msk [vmem:[%s4 + $0x5c] sm:$0xf] %vm837, %v796
  %862 = vst.msk [vmem:[%s4 + $0x60] sm:$0xf] %vm837, %v797
  %863 = vst.msk [vmem:[%s4 + $0x64] sm:$0xf] %vm837, %v798
  %864 = vst.msk [vmem:[%s4 + $0x68] sm:$0xf] %vm837, %v799
  %865 = vst.msk [vmem:[%s4 + $0x6c] sm:$0xf] %vm837, %v800
  %866 = vst.msk [vmem:[%s4 + $0x70] sm:$0xf] %vm837, %v801
  %867 = vst.msk [vmem:[%s4 + $0x74] sm:$0xf] %vm837, %v802
  %868 = vst.msk [vmem:[%s4 + $0x78] sm:$0xf] %vm837, %v803
  %869 = vst.msk [vmem:[%s4 + $0x7c] sm:$0xf] %vm837, %v804
  %870 = vst.msk [vmem:[%s4 + $0x80] sm:$0xf] %vm837, %v805
  %871 = vst.msk [vmem:[%s4 + $0x84] sm:$0xf] %vm837, %v806
  %872 = vst.msk [vmem:[%s4 + $0x88] sm:$0xf] %vm837, %v807
  %873 = vst.msk [vmem:[%s4 + $0x8c] sm:$0xf] %vm837, %v808
  %874 = vst.msk [vmem:[%s4 + $0x90] sm:$0xf] %vm837, %v809
  %875 = vst.msk [vmem:[%s4 + $0x94] sm:$0xf] %vm837, %v810
  %876 = vst.msk [vmem:[%s4 + $0x98] sm:$0xf] %vm837, %v811
  %877 = vst.msk [vmem:[%s4 + $0x9c] sm:$0xf] %vm837, %v812
  %878 = vst.msk [vmem:[%s4 + $0xa0] sm:$0xf] %vm837, %v813
  %879 = vst.msk [vmem:[%s4 + $0xa4] sm:$0xf] %vm837, %v814
  %880 = vst.msk [vmem:[%s4 + $0xa8] sm:$0xf] %vm837, %v815
  %881 = vst.msk [vmem:[%s4 + $0xac] sm:$0xf] %vm837, %v816
  %882 = vst.msk [vmem:[%s4 + $0xb0] sm:$0xf] %vm837, %v817
  %883 = vst.msk [vmem:[%s4 + $0xb4] sm:$0xf] %vm837, %v818
  %884 = vst.msk [vmem:[%s4 + $0xb8] sm:$0xf] %vm837, %v819
  %885 = vst.msk [vmem:[%s4 + $0xbc] sm:$0xf] %vm837, %v820
  %886 = vst.msk [vmem:[%s4 + $0xc0] sm:$0xf] %vm837, %v821
  %887 = vst.msk [vmem:[%s4 + $0xc4] sm:$0xf] %vm837, %v822
  %888 = vst.msk [vmem:[%s4 + $0xc8] sm:$0xf] %vm837, %v823
  %889 = vst.msk [vmem:[%s4 + $0xcc] sm:$0xf] %vm837, %v824
  %890 = vst.msk [vmem:[%s4 + $0xd0] sm:$0xf] %vm837, %v825
  %891 = vst.msk [vmem:[%s4 + $0xd4] sm:$0xf] %vm837, %v826
  %892 = vst.msk [vmem:[%s4 + $0xd8] sm:$0xf] %vm837, %v827
  %893 = vst.msk [vmem:[%s4 + $0xdc] sm:$0xf] %vm837, %v828
  %894 = vst.msk [vmem:[%s4 + $0xe0] sm:$0xf] %vm837, %v829
  %895 = vst.msk [vmem:[%s4 + $0xe4] sm:$0xf] %vm837, %v830
  %896 = vst.msk [vmem:[%s4 + $0xe8] sm:$0xf] %vm837, %v831
  %897 = vst.msk [vmem:[%s4 + $0xec] sm:$0xf] %vm837, %v832
  %898 = vst.msk [vmem:[%s4 + $0xf0] sm:$0xf] %vm837, %v833
  %899 = vst.msk [vmem:[%s4 + $0xf4] sm:$0xf] %vm837, %v834
  %900 = vst.msk [vmem:[%s4 + $0xf8] sm:$0xf] %vm837, %v835
  %901 = vst.msk [vmem:[%s4 + $0xfc] sm:$0xf] %vm837, %v836
  // Predicated region
  $region18: #{tpu_custom_call.1} parent=0 // pred_check
    _
  $region19: #{tpu_custom_call.1} parent=0 // pred_check_branch
    %903 = sbr.rel (0) target = $region21
  $region20: #{tpu_custom_call.1} parent=0 // pred_region
    _
  $region21: #{tpu_custom_call.1} parent=0 // pred_fallthru
    _
  // Predicated region
  $region22: #{tpu_custom_call.1} parent=0 // pred_check
    _
  $region23: #{tpu_custom_call.1} parent=0 // pred_check_branch
    %905 = sbr.rel (0) target = $region25
  $region24: #{tpu_custom_call.1} parent=0 // pred_region
    _
  $region25: #{tpu_custom_call.1} parent=0 // pred_fallthru
    _

// kernel: tpu_custom_call.1
$region0: #{tpu_custom_call.1}
  #allocation0 [shape = 'u32[]', space=smem, size = 0x4, offset = 0x4, fixed_abs, tag = 'smem constant byte address 0x4 - core index']
  #allocation1 [shape = 'u32[72,128]{1,0:T(1,128)}', space=vmem, size = 0x9000, scoped, tag = 'internal scratch']
  %s0 = inlined_call_operand.vmem [shape: bf16[512,4], index: 0, kind: input, shape index: {}]
  %s1 = inlined_call_operand.vmem [shape: bf16[512,32], index: 1, kind: input, shape index: {}]
  %s2 = inlined_call_operand.vmem [shape: bf16[4,32], index: 2, kind: input, shape index: {}]
  %s3 = inlined_call_operand.vmem [shape: f32[1,32], index: 3, kind: input, shape index: {}]
  %s4 = inlined_call_operand.vmem [shape: bf16[512,32], index: 4, kind: output, shape index: {}]
  %s5 = sld [smem:[#allocation0]]
  $region26: #{tpu_custom_call.1} parent=0
    _
  %s7 = ssub.s32 1, %s5
  %s8 = scalar_select 0, %s7, %s5
  // Predicated region
  $region2: #{tpu_custom_call.1} parent=0 // pred_check
    _
  $region3: #{tpu_custom_call.1} parent=0 // pred_check_branch
    %10 = sbr.rel (0) target = $region5
  $region4: #{tpu_custom_call.1} parent=0 // pred_region
    _
  $region5: #{tpu_custom_call.1} parent=0 // pred_fallthru
    _
  // Predicated region
  $region6: #{tpu_custom_call.1} parent=0 // pred_check
    _
  $region7: #{tpu_custom_call.1} parent=0 // pred_check_branch
    %12 = sbr.rel (0) target = $region9
  $region8: #{tpu_custom_call.1} parent=0 // pred_region
    _
  $region9: #{tpu_custom_call.1} parent=0 // pred_fallthru
    _
  // Predicated region
  $region10: #{tpu_custom_call.1} parent=0 // pred_check
    _
  $region11: #{tpu_custom_call.1} parent=0 // pred_check_branch
    %14 = sbr.rel (0) target = $region13
  $region12: #{tpu_custom_call.1} parent=0 // pred_region
    _
  $region13: #{tpu_custom_call.1} parent=0 // pred_fallthru
    _
  // Predicated region
  $region14: #{tpu_custom_call.1} parent=0 // pred_check
    _
  $region15: #{tpu_custom_call.1} parent=0 // pred_check_branch
    %16 = sbr.rel (0) target = $region17
  $region16: #{tpu_custom_call.1} parent=0 // pred_region
    _
  $region17: #{tpu_custom_call.1} parent=0 // pred_fallthru
    _
  %v18 = vld [vmem:[%s0] sm:$0xf]
  %v19 = vld [vmem:[%s0 + $0x4] sm:$0xf]
  %v20 = vld [vmem:[%s0 + $0x8] sm:$0xf]
  %v21 = vld [vmem:[%s0 + $0xc] sm:$0xf]
  %v22 = vld [vmem:[%s0 + $0x10] sm:$0xf]
  %v23 = vld [vmem:[%s0 + $0x14] sm:$0xf]
  %v24 = vld [vmem:[%s0 + $0x18] sm:$0xf]
  %v25 = vld [vmem:[%s0 + $0x1c] sm:$0xf]
  %v26 = vld [vmem:[%s0 + $0x20] sm:$0xf]
  %v27 = vld [vmem:[%s0 + $0x24] sm:$0xf]
  %v28 = vld [vmem:[%s0 + $0x28] sm:$0xf]
  %v29 = vld [vmem:[%s0 + $0x2c] sm:$0xf]
  %v30 = vld [vmem:[%s0 + $0x30] sm:$0xf]
  %v31 = vld [vmem:[%s0 + $0x34] sm:$0xf]
  %v32 = vld [vmem:[%s0 + $0x38] sm:$0xf]
  %v33 = vld [vmem:[%s0 + $0x3c] sm:$0xf]
  %v34 = vld [vmem:[%s0 + $0x40] sm:$0xf]
  %v35 = vld [vmem:[%s0 + $0x44] sm:$0xf]
  %v36 = vld [vmem:[%s0 + $0x48] sm:$0xf]
  %v37 = vld [vmem:[%s0 + $0x4c] sm:$0xf]
  %v38 = vld [vmem:[%s0 + $0x50] sm:$0xf]
  %v39 = vld [vmem:[%s0 + $0x54] sm:$0xf]
  %v40 = vld [vmem:[%s0 + $0x58] sm:$0xf]
  %v41 = vld [vmem:[%s0 + $0x5c] sm:$0xf]
  %v42 = vld [vmem:[%s0 + $0x60] sm:$0xf]
  %v43 = vld [vmem:[%s0 + $0x64] sm:$0xf]
  %v44 = vld [vmem:[%s0 + $0x68] sm:$0xf]
  %v45 = vld [vmem:[%s0 + $0x6c] sm:$0xf]
  %v46 = vld [vmem:[%s0 + $0x70] sm:$0xf]
  %v47 = vld [vmem:[%s0 + $0x74] sm:$0xf]
  %v48 = vld [vmem:[%s0 + $0x78] sm:$0xf]
  %v49 = vld [vmem:[%s0 + $0x7c] sm:$0xf]
  %v50 = vld [vmem:[%s0 + $0x80] sm:$0xf]
  %v51 = vld [vmem:[%s0 + $0x84] sm:$0xf]
  %v52 = vld [vmem:[%s0 + $0x88] sm:$0xf]
  %v53 = vld [vmem:[%s0 + $0x8c] sm:$0xf]
  %v54 = vld [vmem:[%s0 + $0x90] sm:$0xf]
  %v55 = vld [vmem:[%s0 + $0x94] sm:$0xf]
  %v56 = vld [vmem:[%s0 + $0x98] sm:$0xf]
  %v57 = vld [vmem:[%s0 + $0x9c] sm:$0xf]
  %v58 = vld [vmem:[%s0 + $0xa0] sm:$0xf]
  %v59 = vld [vmem:[%s0 + $0xa4] sm:$0xf]
  %v60 = vld [vmem:[%s0 + $0xa8] sm:$0xf]
  %v61 = vld [vmem:[%s0 + $0xac] sm:$0xf]
  %v62 = vld [vmem:[%s0 + $0xb0] sm:$0xf]
  %v63 = vld [vmem:[%s0 + $0xb4] sm:$0xf]
  %v64 = vld [vmem:[%s0 + $0xb8] sm:$0xf]
  %v65 = vld [vmem:[%s0 + $0xbc] sm:$0xf]
  %v66 = vld [vmem:[%s0 + $0xc0] sm:$0xf]
  %v67 = vld [vmem:[%s0 + $0xc4] sm:$0xf]
  %v68 = vld [vmem:[%s0 + $0xc8] sm:$0xf]
  %v69 = vld [vmem:[%s0 + $0xcc] sm:$0xf]
  %v70 = vld [vmem:[%s0 + $0xd0] sm:$0xf]
  %v71 = vld [vmem:[%s0 + $0xd4] sm:$0xf]
  %v72 = vld [vmem:[%s0 + $0xd8] sm:$0xf]
  %v73 = vld [vmem:[%s0 + $0xdc] sm:$0xf]
  %v74 = vld [vmem:[%s0 + $0xe0] sm:$0xf]
  %v75 = vld [vmem:[%s0 + $0xe4] sm:$0xf]
  %v76 = vld [vmem:[%s0 + $0xe8] sm:$0xf]
  %v77 = vld [vmem:[%s0 + $0xec] sm:$0xf]
  %v78 = vld [vmem:[%s0 + $0xf0] sm:$0xf]
  %v79 = vld [vmem:[%s0 + $0xf4] sm:$0xf]
  %v80 = vld [vmem:[%s0 + $0xf8] sm:$0xf]
  %v81 = vld [vmem:[%s0 + $0xfc] sm:$0xf]
  %v82 = vld [vmem:[%s2] sm:$0x3]
  %v83 = vld [vmem:[%s1] sm:$0xf]
  %v84 = vld [vmem:[%s1 + $0x4] sm:$0xf]
  %v85 = vld [vmem:[%s1 + $0x8] sm:$0xf]
  %v86 = vld [vmem:[%s1 + $0xc] sm:$0xf]
  %v87 = vld [vmem:[%s1 + $0x10] sm:$0xf]
  %v88 = vld [vmem:[%s1 + $0x14] sm:$0xf]
  %v89 = vld [vmem:[%s1 + $0x18] sm:$0xf]
  %v90 = vld [vmem:[%s1 + $0x1c] sm:$0xf]
  %v91 = vld [vmem:[%s1 + $0x20] sm:$0xf]
  %v92 = vld [vmem:[%s1 + $0x24] sm:$0xf]
  %v93 = vld [vmem:[%s1 + $0x28] sm:$0xf]
  %v94 = vld [vmem:[%s1 + $0x2c] sm:$0xf]
  %v95 = vld [vmem:[%s1 + $0x30] sm:$0xf]
  %v96 = vld [vmem:[%s1 + $0x34] sm:$0xf]
  %v97 = vld [vmem:[%s1 + $0x38] sm:$0xf]
  %v98 = vld [vmem:[%s1 + $0x3c] sm:$0xf]
  %v99 = vld [vmem:[%s1 + $0x40] sm:$0xf]
  %v100 = vld [vmem:[%s1 + $0x44] sm:$0xf]
  %v101 = vld [vmem:[%s1 + $0x48] sm:$0xf]
  %v102 = vld [vmem:[%s1 + $0x4c] sm:$0xf]
  %v103 = vld [vmem:[%s1 + $0x50] sm:$0xf]
  %v104 = vld [vmem:[%s1 + $0x54] sm:$0xf]
  %v105 = vld [vmem:[%s1 + $0x58] sm:$0xf]
  %v106 = vld [vmem:[%s1 + $0x5c] sm:$0xf]
  %v107 = vld [vmem:[%s1 + $0x60] sm:$0xf]
  %v108 = vld [vmem:[%s1 + $0x64] sm:$0xf]
  %v109 = vld [vmem:[%s1 + $0x68] sm:$0xf]
  %v110 = vld [vmem:[%s1 + $0x6c] sm:$0xf]
  %v111 = vld [vmem:[%s1 + $0x70] sm:$0xf]
  %v112 = vld [vmem:[%s1 + $0x74] sm:$0xf]
  %v113 = vld [vmem:[%s1 + $0x78] sm:$0xf]
  %v114 = vld [vmem:[%s1 + $0x7c] sm:$0xf]
  %v115 = vld [vmem:[%s1 + $0x80] sm:$0xf]
  %v116 = vld [vmem:[%s1 + $0x84] sm:$0xf]
  %v117 = vld [vmem:[%s1 + $0x88] sm:$0xf]
  %v118 = vld [vmem:[%s1 + $0x8c] sm:$0xf]
  %v119 = vld [vmem:[%s1 + $0x90] sm:$0xf]
  %v120 = vld [vmem:[%s1 + $0x94] sm:$0xf]
  %v121 = vld [vmem:[%s1 + $0x98] sm:$0xf]
  %v122 = vld [vmem:[%s1 + $0x9c] sm:$0xf]
  %v123 = vld [vmem:[%s1 + $0xa0] sm:$0xf]
  %v124 = vld [vmem:[%s1 + $0xa4] sm:$0xf]
  %v125 = vld [vmem:[%s1 + $0xa8] sm:$0xf]
  %v126 = vld [vmem:[%s1 + $0xac] sm:$0xf]
  %v127 = vld [vmem:[%s1 + $0xb0] sm:$0xf]
  %v128 = vld [vmem:[%s1 + $0xb4] sm:$0xf]
  %v129 = vld [vmem:[%s1 + $0xb8] sm:$0xf]
  %v130 = vld [vmem:[%s1 + $0xbc] sm:$0xf]
  %v131 = vld [vmem:[%s1 + $0xc0] sm:$0xf]
  %v132 = vld [vmem:[%s1 + $0xc4] sm:$0xf]
  %v133 = vld [vmem:[%s1 + $0xc8] sm:$0xf]
  %v134 = vld [vmem:[%s1 + $0xcc] sm:$0xf]
  %v135 = vld [vmem:[%s1 + $0xd0] sm:$0xf]
  %v136 = vld [vmem:[%s1 + $0xd4] sm:$0xf]
  %v137 = vld [vmem:[%s1 + $0xd8] sm:$0xf]
  %v138 = vld [vmem:[%s1 + $0xdc] sm:$0xf]
  %v139 = vld [vmem:[%s1 + $0xe0] sm:$0xf]
  %v140 = vld [vmem:[%s1 + $0xe4] sm:$0xf]
  %v141 = vld [vmem:[%s1 + $0xe8] sm:$0xf]
  %v142 = vld [vmem:[%s1 + $0xec] sm:$0xf]
  %v143 = vld [vmem:[%s1 + $0xf0] sm:$0xf]
  %v144 = vld [vmem:[%s1 + $0xf4] sm:$0xf]
  %v145 = vld [vmem:[%s1 + $0xf8] sm:$0xf]
  %v146 = vld [vmem:[%s1 + $0xfc] sm:$0xf]
  %v147 = vunpack.c.l.bf16 %v83
  %v148 = vunpack.c.l.bf16 %v84
  %v149 = vunpack.c.l.bf16 %v85
  %v150 = vunpack.c.l.bf16 %v86
  %v151 = vunpack.c.l.bf16 %v87
  %v152 = vunpack.c.l.bf16 %v88
  %v153 = vunpack.c.l.bf16 %v89
  %v154 = vunpack.c.l.bf16 %v90
  %v155 = vunpack.c.l.bf16 %v91
  %v156 = vunpack.c.l.bf16 %v92
  %v157 = vunpack.c.l.bf16 %v93
  %v158 = vunpack.c.l.bf16 %v94
  %v159 = vunpack.c.l.bf16 %v95
  %v160 = vunpack.c.l.bf16 %v96
  %v161 = vunpack.c.l.bf16 %v97
  %v162 = vunpack.c.l.bf16 %v98
  %v163 = vunpack.c.l.bf16 %v99
  %v164 = vunpack.c.l.bf16 %v100
  %v165 = vunpack.c.l.bf16 %v101
  %v166 = vunpack.c.l.bf16 %v102
  %v167 = vunpack.c.l.bf16 %v103
  %v168 = vunpack.c.l.bf16 %v104
  %v169 = vunpack.c.l.bf16 %v105
  %v170 = vunpack.c.l.bf16 %v106
  %v171 = vunpack.c.l.bf16 %v107
  %v172 = vunpack.c.l.bf16 %v108
  %v173 = vunpack.c.l.bf16 %v109
  %v174 = vunpack.c.l.bf16 %v110
  %v175 = vunpack.c.l.bf16 %v111
  %v176 = vunpack.c.l.bf16 %v112
  %v177 = vunpack.c.l.bf16 %v113
  %v178 = vunpack.c.l.bf16 %v114
  %v179 = vunpack.c.l.bf16 %v115
  %v180 = vunpack.c.l.bf16 %v116
  %v181 = vunpack.c.l.bf16 %v117
  %v182 = vunpack.c.l.bf16 %v118
  %v183 = vunpack.c.l.bf16 %v119
  %v184 = vunpack.c.l.bf16 %v120
  %v185 = vunpack.c.l.bf16 %v121
  %v186 = vunpack.c.l.bf16 %v122
  %v187 = vunpack.c.l.bf16 %v123
  %v188 = vunpack.c.l.bf16 %v124
  %v189 = vunpack.c.l.bf16 %v125
  %v190 = vunpack.c.l.bf16 %v126
  %v191 = vunpack.c.l.bf16 %v127
  %v192 = vunpack.c.l.bf16 %v128
  %v193 = vunpack.c.l.bf16 %v129
  %v194 = vunpack.c.l.bf16 %v130
  %v195 = vunpack.c.l.bf16 %v131
  %v196 = vunpack.c.l.bf16 %v132
  %v197 = vunpack.c.l.bf16 %v133
  %v198 = vunpack.c.l.bf16 %v134
  %v199 = vunpack.c.l.bf16 %v135
  %v200 = vunpack.c.l.bf16 %v136
  %v201 = vunpack.c.l.bf16 %v137
  %v202 = vunpack.c.l.bf16 %v138
  %v203 = vunpack.c.l.bf16 %v139
  %v204 = vunpack.c.l.bf16 %v140
  %v205 = vunpack.c.l.bf16 %v141
  %v206 = vunpack.c.l.bf16 %v142
  %v207 = vunpack.c.l.bf16 %v143
  %v208 = vunpack.c.l.bf16 %v144
  %v209 = vunpack.c.l.bf16 %v145
  %v210 = vunpack.c.l.bf16 %v146
  %v275 = vunpack.c.l.b16 %v18
  %v276 = vunpack.c.l.b16 %v19
  %v277 = vunpack.c.l.b16 %v20
  %v278 = vunpack.c.l.b16 %v21
  %v279 = vunpack.c.l.b16 %v22
  %v280 = vunpack.c.l.b16 %v23
  %v281 = vunpack.c.l.b16 %v24
  %v282 = vunpack.c.l.b16 %v25
  %v283 = vunpack.c.l.b16 %v26
  %v284 = vunpack.c.l.b16 %v27
  %v285 = vunpack.c.l.b16 %v28
  %v286 = vunpack.c.l.b16 %v29
  %v287 = vunpack.c.l.b16 %v30
  %v288 = vunpack.c.l.b16 %v31
  %v289 = vunpack.c.l.b16 %v32
  %v290 = vunpack.c.l.b16 %v33
  %v291 = vunpack.c.l.b16 %v34
  %v292 = vunpack.c.l.b16 %v35
  %v293 = vunpack.c.l.b16 %v36
  %v294 = vunpack.c.l.b16 %v37
  %v295 = vunpack.c.l.b16 %v38
  %v296 = vunpack.c.l.b16 %v39
  %v297 = vunpack.c.l.b16 %v40
  %v298 = vunpack.c.l.b16 %v41
  %v299 = vunpack.c.l.b16 %v42
  %v300 = vunpack.c.l.b16 %v43
  %v301 = vunpack.c.l.b16 %v44
  %v302 = vunpack.c.l.b16 %v45
  %v303 = vunpack.c.l.b16 %v46
  %v304 = vunpack.c.l.b16 %v47
  %v305 = vunpack.c.l.b16 %v48
  %v306 = vunpack.c.l.b16 %v49
  %v307 = vunpack.c.l.b16 %v50
  %v308 = vunpack.c.l.b16 %v51
  %v309 = vunpack.c.l.b16 %v52
  %v310 = vunpack.c.l.b16 %v53
  %v311 = vunpack.c.l.b16 %v54
  %v312 = vunpack.c.l.b16 %v55
  %v313 = vunpack.c.l.b16 %v56
  %v314 = vunpack.c.l.b16 %v57
  %v315 = vunpack.c.l.b16 %v58
  %v316 = vunpack.c.l.b16 %v59
  %v317 = vunpack.c.l.b16 %v60
  %v318 = vunpack.c.l.b16 %v61
  %v319 = vunpack.c.l.b16 %v62
  %v320 = vunpack.c.l.b16 %v63
  %v321 = vunpack.c.l.b16 %v64
  %v322 = vunpack.c.l.b16 %v65
  %v323 = vunpack.c.l.b16 %v66
  %v324 = vunpack.c.l.b16 %v67
  %v325 = vunpack.c.l.b16 %v68
  %v326 = vunpack.c.l.b16 %v69
  %v327 = vunpack.c.l.b16 %v70
  %v328 = vunpack.c.l.b16 %v71
  %v329 = vunpack.c.l.b16 %v72
  %v330 = vunpack.c.l.b16 %v73
  %v331 = vunpack.c.l.b16 %v74
  %v332 = vunpack.c.l.b16 %v75
  %v333 = vunpack.c.l.b16 %v76
  %v334 = vunpack.c.l.b16 %v77
  %v335 = vunpack.c.l.b16 %v78
  %v336 = vunpack.c.l.b16 %v79
  %v337 = vunpack.c.l.b16 %v80
  %v338 = vunpack.c.l.b16 %v81
  %v339 = vpack.c.b16 %v276, %v275
  %v340 = vpack.c.b16 %v278, %v277
  %v341 = vpack.c.b16 %v280, %v279
  %v342 = vpack.c.b16 %v282, %v281
  %v343 = vpack.c.b16 %v284, %v283
  %v344 = vpack.c.b16 %v286, %v285
  %v345 = vpack.c.b16 %v288, %v287
  %v346 = vpack.c.b16 %v290, %v289
  %v347 = vpack.c.b16 %v292, %v291
  %v348 = vpack.c.b16 %v294, %v293
  %v349 = vpack.c.b16 %v296, %v295
  %v350 = vpack.c.b16 %v298, %v297
  %v351 = vpack.c.b16 %v300, %v299
  %v352 = vpack.c.b16 %v302, %v301
  %v353 = vpack.c.b16 %v304, %v303
  %v354 = vpack.c.b16 %v306, %v305
  %v355 = vpack.c.b16 %v308, %v307
  %v356 = vpack.c.b16 %v310, %v309
  %v357 = vpack.c.b16 %v312, %v311
  %v358 = vpack.c.b16 %v314, %v313
  %v359 = vpack.c.b16 %v316, %v315
  %v360 = vpack.c.b16 %v318, %v317
  %v361 = vpack.c.b16 %v320, %v319
  %v362 = vpack.c.b16 %v322, %v321
  %v363 = vpack.c.b16 %v324, %v323
  %v364 = vpack.c.b16 %v326, %v325
  %v365 = vpack.c.b16 %v328, %v327
  %v366 = vpack.c.b16 %v330, %v329
  %v367 = vpack.c.b16 %v332, %v331
  %v368 = vpack.c.b16 %v334, %v333
  %v369 = vpack.c.b16 %v336, %v335
  %v370 = vpack.c.b16 %v338, %v337
  %vm371 = vcmask 31744
  %v373 = vsel %vm371, %v339, 0
  %v376 = vsel %vm371, %v340, 0
  %v379 = vsel %vm371, %v341, 0
  %v382 = vsel %vm371, %v342, 0
  %v385 = vsel %vm371, %v343, 0
  %v388 = vsel %vm371, %v344, 0
  %v391 = vsel %vm371, %v345, 0
  %v394 = vsel %vm371, %v346, 0
  %v397 = vsel %vm371, %v347, 0
  %v400 = vsel %vm371, %v348, 0
  %v403 = vsel %vm371, %v349, 0
  %v406 = vsel %vm371, %v350, 0
  %v409 = vsel %vm371, %v351, 0
  %v412 = vsel %vm371, %v352, 0
  %v415 = vsel %vm371, %v353, 0
  %v418 = vsel %vm371, %v354, 0
  %v421 = vsel %vm371, %v355, 0
  %v424 = vsel %vm371, %v356, 0
  %v427 = vsel %vm371, %v357, 0
  %v430 = vsel %vm371, %v358, 0
  %v433 = vsel %vm371, %v359, 0
  %v436 = vsel %vm371, %v360, 0
  %v439 = vsel %vm371, %v361, 0
  %v442 = vsel %vm371, %v362, 0
  %v445 = vsel %vm371, %v363, 0
  %v448 = vsel %vm371, %v364, 0
  %v451 = vsel %vm371, %v365, 0
  %v454 = vsel %vm371, %v366, 0
  %v457 = vsel %vm371, %v367, 0
  %v460 = vsel %vm371, %v368, 0
  %v463 = vsel %vm371, %v369, 0
  %v466 = vsel %vm371, %v370, 0
  %vm468 = vcmask 1041408
  %v470 = vsel %vm468, %v82, 0
  %472 = vmatpush.bf16.msra.mxu0 0
  %473 = vmatpush.bf16.msra.mxu0 0
  %474 = vmatpush.bf16.msra.mxu0 0
  %475 = vmatpush.bf16.msra.mxu0 0
  %476 = vmatpush.bf16.msra.mxu0 0
  %477 = vmatpush.bf16.msra.mxu0 0
  %478 = vmatpush.bf16.msra.mxu0 0
  %479 = vmatpush.bf16.msra.mxu0 %v470
  %480 = vmatmul.bf16.gmra.mxu0 %v373
  %v481 = vpop.f32.mrf.mxu0
  %v482 = vadd.f32 %v147, %v481
  %v483 = vpop.f32.mrf.mxu0
  %v484 = vadd.f32 %v148, %v483
  %485 = vmatmul.bf16.gmra.mxu0 %v376
  %v486 = vpop.f32.mrf.mxu0
  %v487 = vadd.f32 %v149, %v486
  %v488 = vpop.f32.mrf.mxu0
  %v489 = vadd.f32 %v150, %v488
  %490 = vmatmul.bf16.gmra.mxu0 %v379
  %v491 = vpop.f32.mrf.mxu0
  %v492 = vadd.f32 %v151, %v491
  %v493 = vpop.f32.mrf.mxu0
  %v494 = vadd.f32 %v152, %v493
  %495 = vmatmul.bf16.gmra.mxu0 %v382
  %v496 = vpop.f32.mrf.mxu0
  %v497 = vadd.f32 %v153, %v496
  %v498 = vpop.f32.mrf.mxu0
  %v499 = vadd.f32 %v154, %v498
  %500 = vmatmul.bf16.gmra.mxu0 %v385
  %v501 = vpop.f32.mrf.mxu0
  %v502 = vadd.f32 %v155, %v501
  %v503 = vpop.f32.mrf.mxu0
  %v504 = vadd.f32 %v156, %v503
  %505 = vmatmul.bf16.gmra.mxu0 %v388
  %v506 = vpop.f32.mrf.mxu0
  %v507 = vadd.f32 %v157, %v506
  %v508 = vpop.f32.mrf.mxu0
  %v509 = vadd.f32 %v158, %v508
  %510 = vmatmul.bf16.gmra.mxu0 %v391
  %v511 = vpop.f32.mrf.mxu0
  %v512 = vadd.f32 %v159, %v511
  %v513 = vpop.f32.mrf.mxu0
  %v514 = vadd.f32 %v160, %v513
  %515 = vmatmul.bf16.gmra.mxu0 %v394
  %v516 = vpop.f32.mrf.mxu0
  %v517 = vadd.f32 %v161, %v516
  %v518 = vpop.f32.mrf.mxu0
  %v519 = vadd.f32 %v162, %v518
  %520 = vmatmul.bf16.gmra.mxu0 %v397
  %v521 = vpop.f32.mrf.mxu0
  %v522 = vadd.f32 %v163, %v521
  %v523 = vpop.f32.mrf.mxu0
  %v524 = vadd.f32 %v164, %v523
  %525 = vmatmul.bf16.gmra.mxu0 %v400
  %v526 = vpop.f32.mrf.mxu0
  %v527 = vadd.f32 %v165, %v526
  %v528 = vpop.f32.mrf.mxu0
  %v529 = vadd.f32 %v166, %v528
  %530 = vmatmul.bf16.gmra.mxu0 %v403
  %v531 = vpop.f32.mrf.mxu0
  %v532 = vadd.f32 %v167, %v531
  %v533 = vpop.f32.mrf.mxu0
  %v534 = vadd.f32 %v168, %v533
  %535 = vmatmul.bf16.gmra.mxu0 %v406
  %v536 = vpop.f32.mrf.mxu0
  %v537 = vadd.f32 %v169, %v536
  %v538 = vpop.f32.mrf.mxu0
  %v539 = vadd.f32 %v170, %v538
  %540 = vmatmul.bf16.gmra.mxu0 %v409
  %v541 = vpop.f32.mrf.mxu0
  %v542 = vadd.f32 %v171, %v541
  %v543 = vpop.f32.mrf.mxu0
  %v544 = vadd.f32 %v172, %v543
  %545 = vmatmul.bf16.gmra.mxu0 %v412
  %v546 = vpop.f32.mrf.mxu0
  %v547 = vadd.f32 %v173, %v546
  %v548 = vpop.f32.mrf.mxu0
  %v549 = vadd.f32 %v174, %v548
  %550 = vmatmul.bf16.gmra.mxu0 %v415
  %v551 = vpop.f32.mrf.mxu0
  %v552 = vadd.f32 %v175, %v551
  %v553 = vpop.f32.mrf.mxu0
  %v554 = vadd.f32 %v176, %v553
  %555 = vmatmul.bf16.gmra.mxu0 %v418
  %v556 = vpop.f32.mrf.mxu0
  %v557 = vadd.f32 %v177, %v556
  %v558 = vpop.f32.mrf.mxu0
  %v559 = vadd.f32 %v178, %v558
  %560 = vmatmul.bf16.gmra.mxu0 %v421
  %v561 = vpop.f32.mrf.mxu0
  %v562 = vadd.f32 %v179, %v561
  %v563 = vpop.f32.mrf.mxu0
  %v564 = vadd.f32 %v180, %v563
  %565 = vmatmul.bf16.gmra.mxu0 %v424
  %v566 = vpop.f32.mrf.mxu0
  %v567 = vadd.f32 %v181, %v566
  %v568 = vpop.f32.mrf.mxu0
  %v569 = vadd.f32 %v182, %v568
  %570 = vmatmul.bf16.gmra.mxu0 %v427
  %v571 = vpop.f32.mrf.mxu0
  %v572 = vadd.f32 %v183, %v571
  %v573 = vpop.f32.mrf.mxu0
  %v574 = vadd.f32 %v184, %v573
  %575 = vmatmul.bf16.gmra.mxu0 %v430
  %v576 = vpop.f32.mrf.mxu0
  %v577 = vadd.f32 %v185, %v576
  %v578 = vpop.f32.mrf.mxu0
  %v579 = vadd.f32 %v186, %v578
  %580 = vmatmul.bf16.gmra.mxu0 %v433
  %v581 = vpop.f32.mrf.mxu0
  %v582 = vadd.f32 %v187, %v581
  %v583 = vpop.f32.mrf.mxu0
  %v584 = vadd.f32 %v188, %v583
  %585 = vmatmul.bf16.gmra.mxu0 %v436
  %v586 = vpop.f32.mrf.mxu0
  %v587 = vadd.f32 %v189, %v586
  %v588 = vpop.f32.mrf.mxu0
  %v589 = vadd.f32 %v190, %v588
  %590 = vmatmul.bf16.gmra.mxu0 %v439
  %v591 = vpop.f32.mrf.mxu0
  %v592 = vadd.f32 %v191, %v591
  %v593 = vpop.f32.mrf.mxu0
  %v594 = vadd.f32 %v192, %v593
  %595 = vmatmul.bf16.gmra.mxu0 %v442
  %v596 = vpop.f32.mrf.mxu0
  %v597 = vadd.f32 %v193, %v596
  %v598 = vpop.f32.mrf.mxu0
  %v599 = vadd.f32 %v194, %v598
  %600 = vmatmul.bf16.gmra.mxu0 %v445
  %v601 = vpop.f32.mrf.mxu0
  %v602 = vadd.f32 %v195, %v601
  %v603 = vpop.f32.mrf.mxu0
  %v604 = vadd.f32 %v196, %v603
  %605 = vmatmul.bf16.gmra.mxu0 %v448
  %v606 = vpop.f32.mrf.mxu0
  %v607 = vadd.f32 %v197, %v606
  %v608 = vpop.f32.mrf.mxu0
  %v609 = vadd.f32 %v198, %v608
  %610 = vmatmul.bf16.gmra.mxu0 %v451
  %v611 = vpop.f32.mrf.mxu0
  %v612 = vadd.f32 %v199, %v611
  %v613 = vpop.f32.mrf.mxu0
  %v614 = vadd.f32 %v200, %v613
  %615 = vmatmul.bf16.gmra.mxu0 %v454
  %v616 = vpop.f32.mrf.mxu0
  %v617 = vadd.f32 %v201, %v616
  %v618 = vpop.f32.mrf.mxu0
  %v619 = vadd.f32 %v202, %v618
  %620 = vmatmul.bf16.gmra.mxu0 %v457
  %v621 = vpop.f32.mrf.mxu0
  %v622 = vadd.f32 %v203, %v621
  %v623 = vpop.f32.mrf.mxu0
  %v624 = vadd.f32 %v204, %v623
  %625 = vmatmul.bf16.gmra.mxu0 %v460
  %v626 = vpop.f32.mrf.mxu0
  %v627 = vadd.f32 %v205, %v626
  %v628 = vpop.f32.mrf.mxu0
  %v629 = vadd.f32 %v206, %v628
  %630 = vmatmul.bf16.gmra.mxu0 %v463
  %v631 = vpop.f32.mrf.mxu0
  %v632 = vadd.f32 %v207, %v631
  %v633 = vpop.f32.mrf.mxu0
  %v634 = vadd.f32 %v208, %v633
  %635 = vmatmul.bf16.gmra.mxu0 %v466
  %v636 = vpop.f32.mrf.mxu0
  %v637 = vadd.f32 %v209, %v636
  %v638 = vpop.f32.mrf.mxu0
  %v639 = vadd.f32 %v210, %v638
  %640 = vdwg.mxu0
  %v641 = vld [vmem:[%s3] sm:$0x1]
  %v643 = vperm.slane %v641, 0
  %v645 = vadd.f32 %v482, %v643
  %v646 = vadd.f32 %v484, %v643
  %v647 = vadd.f32 %v487, %v643
  %v648 = vadd.f32 %v489, %v643
  %v649 = vadd.f32 %v492, %v643
  %v650 = vadd.f32 %v494, %v643
  %v651 = vadd.f32 %v497, %v643
  %v652 = vadd.f32 %v499, %v643
  %v653 = vadd.f32 %v502, %v643
  %v654 = vadd.f32 %v504, %v643
  %v655 = vadd.f32 %v507, %v643
  %v656 = vadd.f32 %v509, %v643
  %v657 = vadd.f32 %v512, %v643
  %v658 = vadd.f32 %v514, %v643
  %v659 = vadd.f32 %v517, %v643
  %v660 = vadd.f32 %v519, %v643
  %v661 = vadd.f32 %v522, %v643
  %v662 = vadd.f32 %v524, %v643
  %v663 = vadd.f32 %v527, %v643
  %v664 = vadd.f32 %v529, %v643
  %v665 = vadd.f32 %v532, %v643
  %v666 = vadd.f32 %v534, %v643
  %v667 = vadd.f32 %v537, %v643
  %v668 = vadd.f32 %v539, %v643
  %v669 = vadd.f32 %v542, %v643
  %v670 = vadd.f32 %v544, %v643
  %v671 = vadd.f32 %v547, %v643
  %v672 = vadd.f32 %v549, %v643
  %v673 = vadd.f32 %v552, %v643
  %v674 = vadd.f32 %v554, %v643
  %v675 = vadd.f32 %v557, %v643
  %v676 = vadd.f32 %v559, %v643
  %v677 = vadd.f32 %v562, %v643
  %v678 = vadd.f32 %v564, %v643
  %v679 = vadd.f32 %v567, %v643
  %v680 = vadd.f32 %v569, %v643
  %v681 = vadd.f32 %v572, %v643
  %v682 = vadd.f32 %v574, %v643
  %v683 = vadd.f32 %v577, %v643
  %v684 = vadd.f32 %v579, %v643
  %v685 = vadd.f32 %v582, %v643
  %v686 = vadd.f32 %v584, %v643
  %v687 = vadd.f32 %v587, %v643
  %v688 = vadd.f32 %v589, %v643
  %v689 = vadd.f32 %v592, %v643
  %v690 = vadd.f32 %v594, %v643
  %v691 = vadd.f32 %v597, %v643
  %v692 = vadd.f32 %v599, %v643
  %v693 = vadd.f32 %v602, %v643
  %v694 = vadd.f32 %v604, %v643
  %v695 = vadd.f32 %v607, %v643
  %v696 = vadd.f32 %v609, %v643
  %v697 = vadd.f32 %v612, %v643
  %v698 = vadd.f32 %v614, %v643
  %v699 = vadd.f32 %v617, %v643
  %v700 = vadd.f32 %v619, %v643
  %v701 = vadd.f32 %v622, %v643
  %v702 = vadd.f32 %v624, %v643
  %v703 = vadd.f32 %v627, %v643
  %v704 = vadd.f32 %v629, %v643
  %v705 = vadd.f32 %v632, %v643
  %v706 = vadd.f32 %v634, %v643
  %v707 = vadd.f32 %v637, %v643
  %v708 = vadd.f32 %v639, %v643
  %v709 = vmax.f32 %v645, 0.0
  %v710 = vmax.f32 %v646, 0.0
  %v711 = vmax.f32 %v647, 0.0
  %v712 = vmax.f32 %v648, 0.0
  %v713 = vmax.f32 %v649, 0.0
  %v714 = vmax.f32 %v650, 0.0
  %v715 = vmax.f32 %v651, 0.0
  %v716 = vmax.f32 %v652, 0.0
  %v717 = vmax.f32 %v653, 0.0
  %v718 = vmax.f32 %v654, 0.0
  %v719 = vmax.f32 %v655, 0.0
  %v720 = vmax.f32 %v656, 0.0
  %v721 = vmax.f32 %v657, 0.0
  %v722 = vmax.f32 %v658, 0.0
  %v723 = vmax.f32 %v659, 0.0
  %v724 = vmax.f32 %v660, 0.0
  %v725 = vmax.f32 %v661, 0.0
  %v726 = vmax.f32 %v662, 0.0
  %v727 = vmax.f32 %v663, 0.0
  %v728 = vmax.f32 %v664, 0.0
  %v729 = vmax.f32 %v665, 0.0
  %v730 = vmax.f32 %v666, 0.0
  %v731 = vmax.f32 %v667, 0.0
  %v732 = vmax.f32 %v668, 0.0
  %v733 = vmax.f32 %v669, 0.0
  %v734 = vmax.f32 %v670, 0.0
  %v735 = vmax.f32 %v671, 0.0
  %v736 = vmax.f32 %v672, 0.0
  %v737 = vmax.f32 %v673, 0.0
  %v738 = vmax.f32 %v674, 0.0
  %v739 = vmax.f32 %v675, 0.0
  %v740 = vmax.f32 %v676, 0.0
  %v741 = vmax.f32 %v677, 0.0
  %v742 = vmax.f32 %v678, 0.0
  %v743 = vmax.f32 %v679, 0.0
  %v744 = vmax.f32 %v680, 0.0
  %v745 = vmax.f32 %v681, 0.0
  %v746 = vmax.f32 %v682, 0.0
  %v747 = vmax.f32 %v683, 0.0
  %v748 = vmax.f32 %v684, 0.0
  %v749 = vmax.f32 %v685, 0.0
  %v750 = vmax.f32 %v686, 0.0
  %v751 = vmax.f32 %v687, 0.0
  %v752 = vmax.f32 %v688, 0.0
  %v753 = vmax.f32 %v689, 0.0
  %v754 = vmax.f32 %v690, 0.0
  %v755 = vmax.f32 %v691, 0.0
  %v756 = vmax.f32 %v692, 0.0
  %v757 = vmax.f32 %v693, 0.0
  %v758 = vmax.f32 %v694, 0.0
  %v759 = vmax.f32 %v695, 0.0
  %v760 = vmax.f32 %v696, 0.0
  %v761 = vmax.f32 %v697, 0.0
  %v762 = vmax.f32 %v698, 0.0
  %v763 = vmax.f32 %v699, 0.0
  %v764 = vmax.f32 %v700, 0.0
  %v765 = vmax.f32 %v701, 0.0
  %v766 = vmax.f32 %v702, 0.0
  %v767 = vmax.f32 %v703, 0.0
  %v768 = vmax.f32 %v704, 0.0
  %v769 = vmax.f32 %v705, 0.0
  %v770 = vmax.f32 %v706, 0.0
  %v771 = vmax.f32 %v707, 0.0
  %v772 = vmax.f32 %v708, 0.0
  %v773 = vpack.c.bf16 %v709, %v709
  %v774 = vpack.c.bf16 %v710, %v710
  %v775 = vpack.c.bf16 %v711, %v711
  %v776 = vpack.c.bf16 %v712, %v712
  %v777 = vpack.c.bf16 %v713, %v713
  %v778 = vpack.c.bf16 %v714, %v714
  %v779 = vpack.c.bf16 %v715, %v715
  %v780 = vpack.c.bf16 %v716, %v716
  %v781 = vpack.c.bf16 %v717, %v717
  %v782 = vpack.c.bf16 %v718, %v718
  %v783 = vpack.c.bf16 %v719, %v719
  %v784 = vpack.c.bf16 %v720, %v720
  %v785 = vpack.c.bf16 %v721, %v721
  %v786 = vpack.c.bf16 %v722, %v722
  %v787 = vpack.c.bf16 %v723, %v723
  %v788 = vpack.c.bf16 %v724, %v724
  %v789 = vpack.c.bf16 %v725, %v725
  %v790 = vpack.c.bf16 %v726, %v726
  %v791 = vpack.c.bf16 %v727, %v727
  %v792 = vpack.c.bf16 %v728, %v728
  %v793 = vpack.c.bf16 %v729, %v729
  %v794 = vpack.c.bf16 %v730, %v730
  %v795 = vpack.c.bf16 %v731, %v731
  %v796 = vpack.c.bf16 %v732, %v732
  %v797 = vpack.c.bf16 %v733, %v733
  %v798 = vpack.c.bf16 %v734, %v734
  %v799 = vpack.c.bf16 %v735, %v735
  %v800 = vpack.c.bf16 %v736, %v736
  %v801 = vpack.c.bf16 %v737, %v737
  %v802 = vpack.c.bf16 %v738, %v738
  %v803 = vpack.c.bf16 %v739, %v739
  %v804 = vpack.c.bf16 %v740, %v740
  %v805 = vpack.c.bf16 %v741, %v741
  %v806 = vpack.c.bf16 %v742, %v742
  %v807 = vpack.c.bf16 %v743, %v743
  %v808 = vpack.c.bf16 %v744, %v744
  %v809 = vpack.c.bf16 %v745, %v745
  %v810 = vpack.c.bf16 %v746, %v746
  %v811 = vpack.c.bf16 %v747, %v747
  %v812 = vpack.c.bf16 %v748, %v748
  %v813 = vpack.c.bf16 %v749, %v749
  %v814 = vpack.c.bf16 %v750, %v750
  %v815 = vpack.c.bf16 %v751, %v751
  %v816 = vpack.c.bf16 %v752, %v752
  %v817 = vpack.c.bf16 %v753, %v753
  %v818 = vpack.c.bf16 %v754, %v754
  %v819 = vpack.c.bf16 %v755, %v755
  %v820 = vpack.c.bf16 %v756, %v756
  %v821 = vpack.c.bf16 %v757, %v757
  %v822 = vpack.c.bf16 %v758, %v758
  %v823 = vpack.c.bf16 %v759, %v759
  %v824 = vpack.c.bf16 %v760, %v760
  %v825 = vpack.c.bf16 %v761, %v761
  %v826 = vpack.c.bf16 %v762, %v762
  %v827 = vpack.c.bf16 %v763, %v763
  %v828 = vpack.c.bf16 %v764, %v764
  %v829 = vpack.c.bf16 %v765, %v765
  %v830 = vpack.c.bf16 %v766, %v766
  %v831 = vpack.c.bf16 %v767, %v767
  %v832 = vpack.c.bf16 %v768, %v768
  %v833 = vpack.c.bf16 %v769, %v769
  %v834 = vpack.c.bf16 %v770, %v770
  %v835 = vpack.c.bf16 %v771, %v771
  %v836 = vpack.c.bf16 %v772, %v772
  %vm837 = vcmask 257024
  %838 = vst.msk [vmem:[%s4] sm:$0xf] %vm837, %v773
  %839 = vst.msk [vmem:[%s4 + $0x4] sm:$0xf] %vm837, %v774
  %840 = vst.msk [vmem:[%s4 + $0x8] sm:$0xf] %vm837, %v775
  %841 = vst.msk [vmem:[%s4 + $0xc] sm:$0xf] %vm837, %v776
  %842 = vst.msk [vmem:[%s4 + $0x10] sm:$0xf] %vm837, %v777
  %843 = vst.msk [vmem:[%s4 + $0x14] sm:$0xf] %vm837, %v778
  %844 = vst.msk [vmem:[%s4 + $0x18] sm:$0xf] %vm837, %v779
  %845 = vst.msk [vmem:[%s4 + $0x1c] sm:$0xf] %vm837, %v780
  %846 = vst.msk [vmem:[%s4 + $0x20] sm:$0xf] %vm837, %v781
  %847 = vst.msk [vmem:[%s4 + $0x24] sm:$0xf] %vm837, %v782
  %848 = vst.msk [vmem:[%s4 + $0x28] sm:$0xf] %vm837, %v783
  %849 = vst.msk [vmem:[%s4 + $0x2c] sm:$0xf] %vm837, %v784
  %850 = vst.msk [vmem:[%s4 + $0x30] sm:$0xf] %vm837, %v785
  %851 = vst.msk [vmem:[%s4 + $0x34] sm:$0xf] %vm837, %v786
  %852 = vst.msk [vmem:[%s4 + $0x38] sm:$0xf] %vm837, %v787
  %853 = vst.msk [vmem:[%s4 + $0x3c] sm:$0xf] %vm837, %v788
  %854 = vst.msk [vmem:[%s4 + $0x40] sm:$0xf] %vm837, %v789
  %855 = vst.msk [vmem:[%s4 + $0x44] sm:$0xf] %vm837, %v790
  %856 = vst.msk [vmem:[%s4 + $0x48] sm:$0xf] %vm837, %v791
  %857 = vst.msk [vmem:[%s4 + $0x4c] sm:$0xf] %vm837, %v792
  %858 = vst.msk [vmem:[%s4 + $0x50] sm:$0xf] %vm837, %v793
  %859 = vst.msk [vmem:[%s4 + $0x54] sm:$0xf] %vm837, %v794
  %860 = vst.msk [vmem:[%s4 + $0x58] sm:$0xf] %vm837, %v795
  %861 = vst.msk [vmem:[%s4 + $0x5c] sm:$0xf] %vm837, %v796
  %862 = vst.msk [vmem:[%s4 + $0x60] sm:$0xf] %vm837, %v797
  %863 = vst.msk [vmem:[%s4 + $0x64] sm:$0xf] %vm837, %v798
  %864 = vst.msk [vmem:[%s4 + $0x68] sm:$0xf] %vm837, %v799
  %865 = vst.msk [vmem:[%s4 + $0x6c] sm:$0xf] %vm837, %v800
  %866 = vst.msk [vmem:[%s4 + $0x70] sm:$0xf] %vm837, %v801
  %867 = vst.msk [vmem:[%s4 + $0x74] sm:$0xf] %vm837, %v802
  %868 = vst.msk [vmem:[%s4 + $0x78] sm:$0xf] %vm837, %v803
  %869 = vst.msk [vmem:[%s4 + $0x7c] sm:$0xf] %vm837, %v804
  %870 = vst.msk [vmem:[%s4 + $0x80] sm:$0xf] %vm837, %v805
  %871 = vst.msk [vmem:[%s4 + $0x84] sm:$0xf] %vm837, %v806
  %872 = vst.msk [vmem:[%s4 + $0x88] sm:$0xf] %vm837, %v807
  %873 = vst.msk [vmem:[%s4 + $0x8c] sm:$0xf] %vm837, %v808
  %874 = vst.msk [vmem:[%s4 + $0x90] sm:$0xf] %vm837, %v809
  %875 = vst.msk [vmem:[%s4 + $0x94] sm:$0xf] %vm837, %v810
  %876 = vst.msk [vmem:[%s4 + $0x98] sm:$0xf] %vm837, %v811
  %877 = vst.msk [vmem:[%s4 + $0x9c] sm:$0xf] %vm837, %v812
  %878 = vst.msk [vmem:[%s4 + $0xa0] sm:$0xf] %vm837, %v813
  %879 = vst.msk [vmem:[%s4 + $0xa4] sm:$0xf] %vm837, %v814
  %880 = vst.msk [vmem:[%s4 + $0xa8] sm:$0xf] %vm837, %v815
  %881 = vst.msk [vmem:[%s4 + $0xac] sm:$0xf] %vm837, %v816
  %882 = vst.msk [vmem:[%s4 + $0xb0] sm:$0xf] %vm837, %v817
  %883 = vst.msk [vmem:[%s4 + $0xb4] sm:$0xf] %vm837, %v818
  %884 = vst.msk [vmem:[%s4 + $0xb8] sm:$0xf] %vm837, %v819
  %885 = vst.msk [vmem:[%s4 + $0xbc] sm:$0xf] %vm837, %v820
  %886 = vst.msk [vmem:[%s4 + $0xc0] sm:$0xf] %vm837, %v821
  %887 = vst.msk [vmem:[%s4 + $0xc4] sm:$0xf] %vm837, %v822
  %888 = vst.msk [vmem:[%s4 + $0xc8] sm:$0xf] %vm837, %v823
  %889 = vst.msk [vmem:[%s4 + $0xcc] sm:$0xf] %vm837, %v824
  %890 = vst.msk [vmem:[%s4 + $0xd0] sm:$0xf] %vm837, %v825
  %891 = vst.msk [vmem:[%s4 + $0xd4] sm:$0xf] %vm837, %v826
  %892 = vst.msk [vmem:[%s4 + $0xd8] sm:$0xf] %vm837, %v827
  %893 = vst.msk [vmem:[%s4 + $0xdc] sm:$0xf] %vm837, %v828
  %894 = vst.msk [vmem:[%s4 + $0xe0] sm:$0xf] %vm837, %v829
  %895 = vst.msk [vmem:[%s4 + $0xe4] sm:$0xf] %vm837, %v830
  %896 = vst.msk [vmem:[%s4 + $0xe8] sm:$0xf] %vm837, %v831
  %897 = vst.msk [vmem:[%s4 + $0xec] sm:$0xf] %vm837, %v832
  %898 = vst.msk [vmem:[%s4 + $0xf0] sm:$0xf] %vm837, %v833
  %899 = vst.msk [vmem:[%s4 + $0xf4] sm:$0xf] %vm837, %v834
  %900 = vst.msk [vmem:[%s4 + $0xf8] sm:$0xf] %vm837, %v835
  %901 = vst.msk [vmem:[%s4 + $0xfc] sm:$0xf] %vm837, %v836
  // Predicated region
  $region18: #{tpu_custom_call.1} parent=0 // pred_check
    _
  $region19: #{tpu_custom_call.1} parent=0 // pred_check_branch
    %903 = sbr.rel (0) target = $region21
  $region20: #{tpu_custom_call.1} parent=0 // pred_region
    _
  $region21: #{tpu_custom_call.1} parent=0 // pred_fallthru
    _
  // Predicated region
  $region22: #{tpu_custom_call.1} parent=0 // pred_check
    _
  $region23: #{tpu_custom_call.1} parent=0 // pred_check_branch
    %905 = sbr.rel (0) target = $region25
  $region24: #{tpu_custom_call.1} parent=0 // pred_region
    _
  $region25: #{tpu_custom_call.1} parent=0 // pred_fallthru
    _

</llo_original>
